<compile_context>
chip_gen: v7x
topology: tpu7x:2x2x1
jax: 0.10.0
libtpu: 0.0.40
codegen_flags: <defaults>
</compile_context>

<pallas_src>
import jax
import jax.numpy as jnp
from jax.experimental import pallas as pl
from jax.experimental.pallas import tpu as pltpu

BRANCHES = 16
MINI_SPEC_SIZE = 14
IN_NUMEL = MINI_SPEC_SIZE * 100          # 1400
K = 128 // BRANCHES + 1                  # 9
HID = BRANCHES * K                       # 144
N_FINAL = 5                              # five square Linear+SELU layers
OUT_W = 128                              # merged lane-dense output width

_SELU_ALPHA = 1.6732632423543772
_SELU_SCALE = 1.0507009873554805


def _selu(x):
    return _SELU_SCALE * jnp.where(x > 0, x, _SELU_ALPHA * (jnp.exp(x) - 1.0))


def _round_up(n, m):
    return ((n + m - 1) // m) * m


def _velocity_kernel(x_ref, wb_ref, bb_ref, wf_ref, wlast_ref, out_ref):
    # Cast to bf16 in-kernel (input stays f32 in HBM; no separate convert op).
    x = x_ref[...].astype(jnp.bfloat16)

    # 16 branch Linears fused into one (TB,1400)@(1400,144) MXU matmul.
    # BatchNorm2d(1) eval affine is pre-folded into wb/bb host-side;
    # Dropout(0.3) is identity in eval mode.
    h = jnp.dot(x, wb_ref[...], preferred_element_type=jnp.float32)
    h = _selu(h + bb_ref[...])                                   # (TB, 144) f32

    # middle_out = softmax over branches of output index 0 (columns 0..15),
    # restricted to the first 128-lane tile (tile-aligned zero-cost view),
    # computed with masked full-width VPU ops -- no lane movement.
    h0 = h[:, :OUT_W]                                            # (TB, 128)
    col = jax.lax.broadcasted_iota(jnp.int32, h0.shape, 1)
    is_logit = col < BRANCHES
    logits = jnp.where(is_logit, h0, -jnp.inf)
    m = jnp.max(logits, axis=1, keepdims=True)
    e = jnp.exp(logits - m)                      # exactly 0 outside logit cols
    denom = jnp.sum(e, axis=1, keepdims=True)
    soft = e * pl.reciprocal(denom, approx=True)                 # (TB, 128)

    # x = cat([middle_out, y[...,1..8]]) == overwrite cols 0..15 of h.
    # Lane-tile-aligned concat at the 128 boundary.
    z = jnp.concatenate([jnp.where(is_logit, soft, h0), h[:, OUT_W:]], axis=1)

    # finalize: 5 x (Linear no-bias + SELU).
    for l in range(N_FINAL):
        z = _selu(jnp.dot(z.astype(jnp.bfloat16), wf_ref[l],
                          preferred_element_type=jnp.float32))

    # Last Linear(144,1): wlast is zero-padded host-side to (144,128) with the
    # real weight column at lane BRANCHES, so this matmul directly produces
    # the lane-dense output slab (lane 16 carries the velocity logit).
    r = jnp.dot(z.astype(jnp.bfloat16), wlast_ref[...],
                preferred_element_type=jnp.float32)              # (TB, 128)
    vel = 127.0 / (1.0 + jnp.exp(-r))            # lane 16 = sigmoid(logit)*127

    # Single lane-dense output block: cols 0..15 = middle_out, col 16 = vel.
    out_ref[...] = jnp.where(is_logit, soft, vel).astype(out_ref.dtype)


def velocity_estimation(x_nchw, params, *, tb=1024):
    """Forward pass. x_nchw: (B, 1, H, W) with H*W == IN_NUMEL (any float dtype)."""
    B = x_nchw.shape[0]
    x_flat = x_nchw.reshape(B, -1)               # metadata-only reshape (B, 1400)
    assert x_flat.shape[1] == IN_NUMEL

    # Batch tiling: single full-batch tile for small B (no pad, no extra copy);
    # otherwise the smallest sublane-aligned tile giving >= ceil(B/tb) steps,
    # bumped to >= 2 steps so v7x megacore can shard the batch axis.
    n_steps = -(-B // tb)
    if n_steps == 1 and B >= 64:
        n_steps = 2
    if n_steps == 1:
        TB, B_pad = B, B
    else:
        TB = _round_up(-(-B // n_steps), 8)
        B_pad = n_steps * TB
    if B_pad != B:
        # Ragged last tile: pads at most 8*n_steps rows; padded rows are
        # computed and discarded by the wrapper slice below.
        x_flat = jnp.pad(x_flat, ((0, B_pad - B), (0, 0)))

    out = pl.pallas_call(
        _velocity_kernel,
        out_shape=jax.ShapeDtypeStruct((B_pad, OUT_W), jnp.float32),
        grid=(B_pad // TB,),
        in_specs=[
            pl.BlockSpec((TB, IN_NUMEL), lambda i: (i, 0)),          # x tile
            pl.BlockSpec((IN_NUMEL, HID), lambda i: (0, 0)),         # wb (resident)
            pl.BlockSpec((1, HID), lambda i: (0, 0)),                # bb (resident)
            pl.BlockSpec((N_FINAL, HID, HID), lambda i: (0, 0, 0)),  # wf (resident)
            pl.BlockSpec((HID, OUT_W), lambda i: (0, 0)),            # wlast padded
        ],
        out_specs=pl.BlockSpec((TB, OUT_W), lambda i: (i, 0)),
        compiler_params=pltpu.CompilerParams(
            dimension_semantics=("parallel",),
            vmem_limit_bytes=32 << 20),
    )(x_flat, params["wb"], params["bb"], params["wf"], params["wlast"])

    vel = out[:B, BRANCHES]          # sigmoid(logit) * 127        -> (B,)
    mid = out[:B, :BRANCHES]         # middle_out (softmax)        -> (B, 16)
    return vel, mid


def init_params(key):
    """Deterministic synthetic parameters matching the module's shapes,
    with eval-mode BatchNorm folded into the branch layer, bf16 weights,
    and the final Linear(144,1) zero-padded to a (144,128) output slab."""
    ks = jax.random.split(key, 4)

    # BatchNorm2d(1) eval: gamma=1, beta=0, running_mean=0, running_var=1.
    gamma, beta, r_mean, r_var, eps = 1.0, 0.0, 0.0, 1.0, 1e-5
    scale = gamma / jnp.sqrt(jnp.float32(r_var + eps))
    shift = beta - r_mean * scale

    # per-branch Linear(in_numel, k): weights (BRANCHES, K, IN_NUMEL), bias (BRANCHES, K)
    bnd = 1.0 / jnp.sqrt(jnp.float32(IN_NUMEL))
    w_branch = jax.random.uniform(ks[0], (BRANCHES, K, IN_NUMEL),
                                  jnp.float32, -bnd, bnd)
    b_branch = jax.random.uniform(ks[1], (BRANCHES, K), jnp.float32, -bnd, bnd)
    # reorder to columns j*BRANCHES + i  ->  wb[n, j*B + i] = w_branch[i, j, n]
    # (matches the torch.cat([y[...,1], ..., y[...,k-1]]) column order).
    wb = jnp.transpose(w_branch, (2, 1, 0)).reshape(IN_NUMEL, HID)
    bb = jnp.transpose(b_branch, (1, 0)).reshape(1, HID)

    # Fold BN:  (scale*x + shift) @ wb + bb == x @ (scale*wb) + (bb + shift*colsum(wb))
    wb_folded = scale * wb
    bb_folded = bb + shift * jnp.sum(wb, axis=0, keepdims=True)

    # finalize: 5 x Linear(HID, HID, bias=False) + Linear(HID, 1, bias=False)
    bnd_h = 1.0 / jnp.sqrt(jnp.float32(HID))
    wf = jax.random.uniform(ks[2], (N_FINAL, HID, HID), jnp.float32, -bnd_h, bnd_h)
    wlast_col = jax.random.uniform(ks[3], (HID,), jnp.float32, -bnd_h, bnd_h)
    # Pad the (144,1) weight to (144,128) with the real column at lane BRANCHES
    # so the last matmul already produces the lane-dense output slab.
    wlast = jnp.zeros((HID, OUT_W), jnp.float32).at[:, BRANCHES].set(wlast_col)

    return {
        "wb": wb_folded.astype(jnp.bfloat16),
        "bb": bb_folded.astype(jnp.float32),
        "wf": wf.astype(jnp.bfloat16),
        "wlast": wlast.astype(jnp.bfloat16),
    }


if __name__ == "__main__":
    key = jax.random.PRNGKey(0)
    k_in, k_par = jax.random.split(key)

    B = 2
    x = jax.random.normal(k_in, (B, 1, MINI_SPEC_SIZE, 100), dtype=jnp.float32)
    params = init_params(k_par)

    vel, middle_out = velocity_estimation(x, params)
    jax.block_until_ready((vel, middle_out))

    assert vel.shape == (B,)
    assert middle_out.shape == (B, BRANCHES)
    assert bool(jnp.all(jnp.isfinite(vel)))
    assert bool(jnp.all(jnp.isfinite(middle_out)))
    # middle_out rows should be (approximately) a probability distribution.
    assert bool(jnp.all(jnp.abs(jnp.sum(middle_out, axis=1) - 1.0) < 1e-2))
    print("KERNEL_OK")
</pallas_src>

<mosaic_0001>
module attributes {stable_mosaic.version = 11 : i64} {
  func.func @_velocity_kernel(%arg0: i32, %arg1: memref<2x1400xf32, #tpu.memory_space<vmem>>, %arg2: memref<1400x144xbf16, #tpu.memory_space<vmem>>, %arg3: memref<1x144xf32, #tpu.memory_space<vmem>>, %arg4: memref<5x144x144xbf16, #tpu.memory_space<vmem>>, %arg5: memref<144x128xbf16, #tpu.memory_space<vmem>>, %arg6: memref<2x128xf32, #tpu.memory_space<vmem>>) attributes {dimension_semantics = [#tpu.dimension_semantics<parallel>], iteration_bounds = array<i64: 1>, scalar_prefetch = 0 : i64, scratch_operands = 0 : i64, tpu.core_type = #tpu.core_type<tc>, window_params = [{transform_indices = @transform_0, window_bounds = array<i64: 2, 1400>}, {pipeline_mode = #tpu.pipeline_mode<synchronous>, transform_indices = @transform_1, window_bounds = array<i64: 1400, 144>}, {pipeline_mode = #tpu.pipeline_mode<synchronous>, transform_indices = @transform_2, window_bounds = array<i64: 1, 144>}, {pipeline_mode = #tpu.pipeline_mode<synchronous>, transform_indices = @transform_3, window_bounds = array<i64: 5, 144, 144>}, {pipeline_mode = #tpu.pipeline_mode<synchronous>, transform_indices = @transform_4, window_bounds = array<i64: 144, 128>}, {transform_indices = @transform_5, window_bounds = array<i64: 2, 128>}]} {
    %c0 = arith.constant 0 : index
    %c0_0 = arith.constant 0 : index
    %0 = vector.load %arg1[%c0, %c0_0] : memref<2x1400xf32, #tpu.memory_space<vmem>>, vector<2x1400xf32>
    %1 = arith.truncf %0 : vector<2x1400xf32> to vector<2x1400xbf16>
    %c0_1 = arith.constant 0 : index
    %c0_2 = arith.constant 0 : index
    %2 = vector.load %arg2[%c0_1, %c0_2] : memref<1400x144xbf16, #tpu.memory_space<vmem>>, vector<1400x144xbf16>
    %cst = arith.constant dense<0.000000e+00> : vector<2x144xf32>
    %3 = tpu.matmul %1, %2, %cst {dimension_numbers = #tpu.dot_dimension_numbers<[1], [0], [0], [1], [0, 0, 1, 1], [], []>} : vector<2x1400xbf16>, vector<1400x144xbf16>, vector<2x144xf32> -> vector<2x144xf32>
    %c0_3 = arith.constant 0 : index
    %c0_4 = arith.constant 0 : index
    %4 = vector.load %arg3[%c0_3, %c0_4] : memref<1x144xf32, #tpu.memory_space<vmem>>, vector<1x144xf32>
    %5 = vector.broadcast %4 : vector<1x144xf32> to vector<2x144xf32>
    %6 = arith.addf %3, %5 : vector<2x144xf32>
    %cst_5 = arith.constant 0.000000e+00 : f32
    %7 = vector.broadcast %cst_5 : f32 to vector<2x144xf32>
    %8 = arith.cmpf ogt, %6, %7 : vector<2x144xf32>
    %9 = math.exp %6 : vector<2x144xf32>
    %cst_6 = arith.constant 1.000000e+00 : f32
    %10 = vector.broadcast %cst_6 : f32 to vector<2x144xf32>
    %11 = arith.subf %9, %10 : vector<2x144xf32>
    %cst_7 = arith.constant 1.67326319 : f32
    %12 = vector.broadcast %cst_7 : f32 to vector<2x144xf32>
    %13 = arith.mulf %12, %11 : vector<2x144xf32>
    %14 = arith.select %8, %6, %13 : vector<2x144xi1>, vector<2x144xf32>
    %cst_8 = arith.constant 1.05070102 : f32
    %15 = vector.broadcast %cst_8 : f32 to vector<2x144xf32>
    %16 = arith.mulf %15, %14 : vector<2x144xf32>
    %17 = vector.extract_strided_slice %16 {offsets = [0, 0], sizes = [2, 128], strides = [1, 1]} : vector<2x144xf32> to vector<2x128xf32>
    %18 = tpu.iota {dimensions = array<i32: 1>} : vector<2x128xi32>
    %c16_i32 = arith.constant 16 : i32
    %19 = vector.broadcast %c16_i32 : i32 to vector<2x128xi32>
    %20 = arith.cmpi slt, %18, %19 : vector<2x128xi32>
    %cst_9 = arith.constant 0xFF800000 : f32
    %21 = vector.broadcast %cst_9 : f32 to vector<2x128xf32>
    %22 = arith.select %20, %17, %21 : vector<2x128xi1>, vector<2x128xf32>
    %cst_10 = arith.constant dense<0xFF800000> : vector<2xf32>
    %23 = vector.multi_reduction <maximumf>, %22, %cst_10 [1] : vector<2x128xf32> to vector<2xf32>
    %24 = vector.shape_cast %23 : vector<2xf32> to vector<2x1xf32>
    %25 = vector.broadcast %24 : vector<2x1xf32> to vector<2x128xf32>
    %26 = arith.subf %22, %25 : vector<2x128xf32>
    %27 = math.exp %26 : vector<2x128xf32>
    %cst_11 = arith.constant dense<0.000000e+00> : vector<2xf32>
    %28 = vector.multi_reduction <add>, %27, %cst_11 [1] : vector<2x128xf32> to vector<2xf32>
    %29 = vector.shape_cast %28 : vector<2xf32> to vector<2x1xf32>
    %30 = tpu.reciprocal %29 {approx = true} : vector<2x1xf32> -> vector<2x1xf32>
    %31 = vector.broadcast %30 : vector<2x1xf32> to vector<2x128xf32>
    %32 = arith.mulf %27, %31 : vector<2x128xf32>
    %33 = arith.select %20, %32, %17 : vector<2x128xi1>, vector<2x128xf32>
    %34 = vector.extract_strided_slice %16 {offsets = [0, 128], sizes = [2, 16], strides = [1, 1]} : vector<2x144xf32> to vector<2x16xf32>
    %35 = tpu.concatenate %33, %34 in 1 : vector<2x128xf32>, vector<2x16xf32> -> vector<2x144xf32>
    %36 = arith.truncf %35 : vector<2x144xf32> to vector<2x144xbf16>
    %c0_12 = arith.constant 0 : index
    %c0_13 = arith.constant 0 : index
    %c0_14 = arith.constant 0 : index
    %37 = vector.load %arg4[%c0_12, %c0_13, %c0_14] : memref<5x144x144xbf16, #tpu.memory_space<vmem>>, vector<1x144x144xbf16>
    %38 = vector.shape_cast %37 : vector<1x144x144xbf16> to vector<144x144xbf16>
    %cst_15 = arith.constant dense<0.000000e+00> : vector<2x144xf32>
    %39 = tpu.matmul %36, %38, %cst_15 {dimension_numbers = #tpu.dot_dimension_numbers<[1], [0], [0], [1], [0, 0, 1, 1], [], []>} : vector<2x144xbf16>, vector<144x144xbf16>, vector<2x144xf32> -> vector<2x144xf32>
    %cst_16 = arith.constant 0.000000e+00 : f32
    %40 = vector.broadcast %cst_16 : f32 to vector<2x144xf32>
    %41 = arith.cmpf ogt, %39, %40 : vector<2x144xf32>
    %42 = math.exp %39 : vector<2x144xf32>
    %cst_17 = arith.constant 1.000000e+00 : f32
    %43 = vector.broadcast %cst_17 : f32 to vector<2x144xf32>
    %44 = arith.subf %42, %43 : vector<2x144xf32>
    %cst_18 = arith.constant 1.67326319 : f32
    %45 = vector.broadcast %cst_18 : f32 to vector<2x144xf32>
    %46 = arith.mulf %45, %44 : vector<2x144xf32>
    %47 = arith.select %41, %39, %46 : vector<2x144xi1>, vector<2x144xf32>
    %cst_19 = arith.constant 1.05070102 : f32
    %48 = vector.broadcast %cst_19 : f32 to vector<2x144xf32>
    %49 = arith.mulf %48, %47 : vector<2x144xf32>
    %50 = arith.truncf %49 : vector<2x144xf32> to vector<2x144xbf16>
    %c1 = arith.constant 1 : index
    %c0_20 = arith.constant 0 : index
    %c0_21 = arith.constant 0 : index
    %51 = vector.load %arg4[%c1, %c0_20, %c0_21] : memref<5x144x144xbf16, #tpu.memory_space<vmem>>, vector<1x144x144xbf16>
    %52 = vector.shape_cast %51 : vector<1x144x144xbf16> to vector<144x144xbf16>
    %cst_22 = arith.constant dense<0.000000e+00> : vector<2x144xf32>
    %53 = tpu.matmul %50, %52, %cst_22 {dimension_numbers = #tpu.dot_dimension_numbers<[1], [0], [0], [1], [0, 0, 1, 1], [], []>} : vector<2x144xbf16>, vector<144x144xbf16>, vector<2x144xf32> -> vector<2x144xf32>
    %cst_23 = arith.constant 0.000000e+00 : f32
    %54 = vector.broadcast %cst_23 : f32 to vector<2x144xf32>
    %55 = arith.cmpf ogt, %53, %54 : vector<2x144xf32>
    %56 = math.exp %53 : vector<2x144xf32>
    %cst_24 = arith.constant 1.000000e+00 : f32
    %57 = vector.broadcast %cst_24 : f32 to vector<2x144xf32>
    %58 = arith.subf %56, %57 : vector<2x144xf32>
    %cst_25 = arith.constant 1.67326319 : f32
    %59 = vector.broadcast %cst_25 : f32 to vector<2x144xf32>
    %60 = arith.mulf %59, %58 : vector<2x144xf32>
    %61 = arith.select %55, %53, %60 : vector<2x144xi1>, vector<2x144xf32>
    %cst_26 = arith.constant 1.05070102 : f32
    %62 = vector.broadcast %cst_26 : f32 to vector<2x144xf32>
    %63 = arith.mulf %62, %61 : vector<2x144xf32>
    %64 = arith.truncf %63 : vector<2x144xf32> to vector<2x144xbf16>
    %c2 = arith.constant 2 : index
    %c0_27 = arith.constant 0 : index
    %c0_28 = arith.constant 0 : index
    %65 = vector.load %arg4[%c2, %c0_27, %c0_28] : memref<5x144x144xbf16, #tpu.memory_space<vmem>>, vector<1x144x144xbf16>
    %66 = vector.shape_cast %65 : vector<1x144x144xbf16> to vector<144x144xbf16>
    %cst_29 = arith.constant dense<0.000000e+00> : vector<2x144xf32>
    %67 = tpu.matmul %64, %66, %cst_29 {dimension_numbers = #tpu.dot_dimension_numbers<[1], [0], [0], [1], [0, 0, 1, 1], [], []>} : vector<2x144xbf16>, vector<144x144xbf16>, vector<2x144xf32> -> vector<2x144xf32>
    %cst_30 = arith.constant 0.000000e+00 : f32
    %68 = vector.broadcast %cst_30 : f32 to vector<2x144xf32>
    %69 = arith.cmpf ogt, %67, %68 : vector<2x144xf32>
    %70 = math.exp %67 : vector<2x144xf32>
    %cst_31 = arith.constant 1.000000e+00 : f32
    %71 = vector.broadcast %cst_31 : f32 to vector<2x144xf32>
    %72 = arith.subf %70, %71 : vector<2x144xf32>
    %cst_32 = arith.constant 1.67326319 : f32
    %73 = vector.broadcast %cst_32 : f32 to vector<2x144xf32>
    %74 = arith.mulf %73, %72 : vector<2x144xf32>
    %75 = arith.select %69, %67, %74 : vector<2x144xi1>, vector<2x144xf32>
    %cst_33 = arith.constant 1.05070102 : f32
    %76 = vector.broadcast %cst_33 : f32 to vector<2x144xf32>
    %77 = arith.mulf %76, %75 : vector<2x144xf32>
    %78 = arith.truncf %77 : vector<2x144xf32> to vector<2x144xbf16>
    %c3 = arith.constant 3 : index
    %c0_34 = arith.constant 0 : index
    %c0_35 = arith.constant 0 : index
    %79 = vector.load %arg4[%c3, %c0_34, %c0_35] : memref<5x144x144xbf16, #tpu.memory_space<vmem>>, vector<1x144x144xbf16>
    %80 = vector.shape_cast %79 : vector<1x144x144xbf16> to vector<144x144xbf16>
    %cst_36 = arith.constant dense<0.000000e+00> : vector<2x144xf32>
    %81 = tpu.matmul %78, %80, %cst_36 {dimension_numbers = #tpu.dot_dimension_numbers<[1], [0], [0], [1], [0, 0, 1, 1], [], []>} : vector<2x144xbf16>, vector<144x144xbf16>, vector<2x144xf32> -> vector<2x144xf32>
    %cst_37 = arith.constant 0.000000e+00 : f32
    %82 = vector.broadcast %cst_37 : f32 to vector<2x144xf32>
    %83 = arith.cmpf ogt, %81, %82 : vector<2x144xf32>
    %84 = math.exp %81 : vector<2x144xf32>
    %cst_38 = arith.constant 1.000000e+00 : f32
    %85 = vector.broadcast %cst_38 : f32 to vector<2x144xf32>
    %86 = arith.subf %84, %85 : vector<2x144xf32>
    %cst_39 = arith.constant 1.67326319 : f32
    %87 = vector.broadcast %cst_39 : f32 to vector<2x144xf32>
    %88 = arith.mulf %87, %86 : vector<2x144xf32>
    %89 = arith.select %83, %81, %88 : vector<2x144xi1>, vector<2x144xf32>
    %cst_40 = arith.constant 1.05070102 : f32
    %90 = vector.broadcast %cst_40 : f32 to vector<2x144xf32>
    %91 = arith.mulf %90, %89 : vector<2x144xf32>
    %92 = arith.truncf %91 : vector<2x144xf32> to vector<2x144xbf16>
    %c4 = arith.constant 4 : index
    %c0_41 = arith.constant 0 : index
    %c0_42 = arith.constant 0 : index
    %93 = vector.load %arg4[%c4, %c0_41, %c0_42] : memref<5x144x144xbf16, #tpu.memory_space<vmem>>, vector<1x144x144xbf16>
    %94 = vector.shape_cast %93 : vector<1x144x144xbf16> to vector<144x144xbf16>
    %cst_43 = arith.constant dense<0.000000e+00> : vector<2x144xf32>
    %95 = tpu.matmul %92, %94, %cst_43 {dimension_numbers = #tpu.dot_dimension_numbers<[1], [0], [0], [1], [0, 0, 1, 1], [], []>} : vector<2x144xbf16>, vector<144x144xbf16>, vector<2x144xf32> -> vector<2x144xf32>
    %cst_44 = arith.constant 0.000000e+00 : f32
    %96 = vector.broadcast %cst_44 : f32 to vector<2x144xf32>
    %97 = arith.cmpf ogt, %95, %96 : vector<2x144xf32>
    %98 = math.exp %95 : vector<2x144xf32>
    %cst_45 = arith.constant 1.000000e+00 : f32
    %99 = vector.broadcast %cst_45 : f32 to vector<2x144xf32>
    %100 = arith.subf %98, %99 : vector<2x144xf32>
    %cst_46 = arith.constant 1.67326319 : f32
    %101 = vector.broadcast %cst_46 : f32 to vector<2x144xf32>
    %102 = arith.mulf %101, %100 : vector<2x144xf32>
    %103 = arith.select %97, %95, %102 : vector<2x144xi1>, vector<2x144xf32>
    %cst_47 = arith.constant 1.05070102 : f32
    %104 = vector.broadcast %cst_47 : f32 to vector<2x144xf32>
    %105 = arith.mulf %104, %103 : vector<2x144xf32>
    %106 = arith.truncf %105 : vector<2x144xf32> to vector<2x144xbf16>
    %c0_48 = arith.constant 0 : index
    %c0_49 = arith.constant 0 : index
    %107 = vector.load %arg5[%c0_48, %c0_49] : memref<144x128xbf16, #tpu.memory_space<vmem>>, vector<144x128xbf16>
    %cst_50 = arith.constant dense<0.000000e+00> : vector<2x128xf32>
    %108 = tpu.matmul %106, %107, %cst_50 {dimension_numbers = #tpu.dot_dimension_numbers<[1], [0], [0], [1], [0, 0, 1, 1], [], []>} : vector<2x144xbf16>, vector<144x128xbf16>, vector<2x128xf32> -> vector<2x128xf32>
    %cst_51 = arith.constant 0.000000e+00 : f32
    %109 = vector.broadcast %cst_51 : f32 to vector<2x128xf32>
    %110 = arith.subf %109, %108 : vector<2x128xf32>
    %111 = math.exp %110 : vector<2x128xf32>
    %cst_52 = arith.constant 1.000000e+00 : f32
    %112 = vector.broadcast %cst_52 : f32 to vector<2x128xf32>
    %113 = arith.addf %112, %111 : vector<2x128xf32>
    %cst_53 = arith.constant 1.270000e+02 : f32
    %114 = vector.broadcast %cst_53 : f32 to vector<2x128xf32>
    %115 = arith.divf %114, %113 : vector<2x128xf32>
    %116 = arith.select %20, %32, %115 : vector<2x128xi1>, vector<2x128xf32>
    %c0_54 = arith.constant 0 : index
    %c0_55 = arith.constant 0 : index
    %117 = vector.load %arg6[%c0_54, %c0_55] : memref<2x128xf32, #tpu.memory_space<vmem>>, vector<2x128xf32>
    tpu.vector_store %arg6[%c0_54, %c0_55], %116 {strides = array<i32>} : memref<2x128xf32, #tpu.memory_space<vmem>>, vector<2x128xf32>,
    return
  }
  func.func @transform_0(%arg0: i32) -> (i32, i32) {
    %c0_i32 = arith.constant 0 : i32
    %c0_i32_0 = arith.constant 0 : i32
    return %arg0, %c0_i32 : i32, i32
  }
  func.func @transform_1(%arg0: i32) -> (i32, i32) {
    %c0_i32 = arith.constant 0 : i32
    %c0_i32_0 = arith.constant 0 : i32
    %c0_i32_1 = arith.constant 0 : i32
    return %c0_i32, %c0_i32_0 : i32, i32
  }
  func.func @transform_2(%arg0: i32) -> (i32, i32) {
    %c0_i32 = arith.constant 0 : i32
    %c0_i32_0 = arith.constant 0 : i32
    %c0_i32_1 = arith.constant 0 : i32
    return %c0_i32, %c0_i32_0 : i32, i32
  }
  func.func @transform_3(%arg0: i32) -> (i32, i32, i32) {
    %c0_i32 = arith.constant 0 : i32
    %c0_i32_0 = arith.constant 0 : i32
    %c0_i32_1 = arith.constant 0 : i32
    %c0_i32_2 = arith.constant 0 : i32
    return %c0_i32, %c0_i32_0, %c0_i32_1 : i32, i32, i32
  }
  func.func @transform_4(%arg0: i32) -> (i32, i32) {
    %c0_i32 = arith.constant 0 : i32
    %c0_i32_0 = arith.constant 0 : i32
    %c0_i32_1 = arith.constant 0 : i32
    return %c0_i32, %c0_i32_0 : i32, i32
  }
  func.func @transform_5(%arg0: i32) -> (i32, i32) {
    %c0_i32 = arith.constant 0 : i32
    %c0_i32_0 = arith.constant 0 : i32
    return %arg0, %c0_i32 : i32, i32
  }
}

</mosaic_0001>

<llo_original>
// kernel: tpu_custom_call.1
$region0: #{tpu_custom_call.1}
  #allocation0 [shape = 'u32[]', space=smem, size = 0x4, offset = 0x4, fixed_abs, tag = 'smem constant byte address 0x4 - core index']
  #allocation1 [shape = 'u32[144,128]{1,0:T(1,128)}', space=vmem, size = 0x12000, scoped, tag = 'internal scratch']
  %s0 = inlined_call_operand.vmem [shape: f32[2,1400], index: 0, kind: input, shape index: {}]
  %s1 = inlined_call_operand.vmem [shape: bf16[1400,144], index: 1, kind: input, shape index: {}]
  %s2 = inlined_call_operand.vmem [shape: f32[1,144], index: 2, kind: input, shape index: {}]
  %s3 = inlined_call_operand.vmem [shape: bf16[5,144,144], index: 3, kind: input, shape index: {}]
  %s4 = inlined_call_operand.vmem [shape: bf16[144,128], index: 4, kind: input, shape index: {}]
  %s5 = inlined_call_operand.hbm [shape: f32[2,128], index: 5, kind: output, shape index: {}]
  %s6 = sld [smem:[#allocation0]]
  $region30: #{tpu_custom_call.1} parent=0
    _
  %s8 = ssub.s32 1, %s6
  %s9 = scalar_select 0, %s8, %s6
  $region1: #{tpu_custom_call.1} parent=0
    #allocation2 [shape = 'u8[1024]{0}', space=vmem, size = 0x400, scoped, tag = 'output window, operand 0, single buffered']
    #allocation3 [shape = 's32[1]{0}', space=sflag, size = 0x4, scoped, tag = 'scoped memory for tpu_custom_call.1']
    %10 = vsyncpa [#allocation3], 0
    // Predicated region
    $region2: #{tpu_custom_call.1} parent=1 // pred_check
      _
    $region3: #{tpu_custom_call.1} parent=1 // pred_check_branch
      %12 = sbr.rel (0) target = $region5
    $region4: #{tpu_custom_call.1} parent=1 // pred_region
      _
    $region5: #{tpu_custom_call.1} parent=1 // pred_fallthru
      _
    // Predicated region
    $region6: #{tpu_custom_call.1} parent=1 // pred_check
      _
    $region7: #{tpu_custom_call.1} parent=1 // pred_check_branch
      %14 = sbr.rel (0) target = $region9
    $region8: #{tpu_custom_call.1} parent=1 // pred_region
      _
    $region9: #{tpu_custom_call.1} parent=1 // pred_fallthru
      _
    // Predicated region
    $region10: #{tpu_custom_call.1} parent=1 // pred_check
      _
    $region11: #{tpu_custom_call.1} parent=1 // pred_check_branch
      %16 = sbr.rel (0) target = $region13
    $region12: #{tpu_custom_call.1} parent=1 // pred_region
      _
    $region13: #{tpu_custom_call.1} parent=1 // pred_fallthru
      _
    // Predicated region
    $region14: #{tpu_custom_call.1} parent=1 // pred_check
      _
    $region15: #{tpu_custom_call.1} parent=1 // pred_check_branch
      %18 = sbr.rel (0) target = $region17
    $region16: #{tpu_custom_call.1} parent=1 // pred_region
      _
    $region17: #{tpu_custom_call.1} parent=1 // pred_fallthru
      _
    // Predicated region
    $region18: #{tpu_custom_call.1} parent=1 // pred_check
      _
    $region19: #{tpu_custom_call.1} parent=1 // pred_check_branch
      %20 = sbr.rel (0) target = $region21
    $region20: #{tpu_custom_call.1} parent=1 // pred_region
      _
    $region21: #{tpu_custom_call.1} parent=1 // pred_fallthru
      _
    %v22 = vld [vmem:[%s0] sm:$0xff]
    %v23 = vld [vmem:[%s0 + $0x8] sm:$0xff]
    %v24 = vld [vmem:[%s0 + $0x10] sm:$0x3f]
    %v28 = vcombine.high %v22, %v22
    %v30 = vunpack.c.l.s4 1983009808
    %v31 = vunpack.c.0.s8 %v30
    %v32 = vlaneseq
    %v33 = vshrl.u32 %v32, 7
    %v34 = vsub.s32 %v31, %v33
    %v35 = vrot.slane %v22, %v34
    %v37 = vunpack.c.l.s4 1983009808
    %v38 = vunpack.c.0.s8 %v37
    %v39 = vlaneseq
    %v40 = vshrl.u32 %v39, 7
    %v41 = vsub.s32 %v38, %v40
    %v42 = vrot.slane %v28, %v41
    %v43 = vcombine.high %v35, %v35
    %v44 = vcombine.high %v42, %v42
    %v45 = vcombine.high %v23, %v23
    %v47 = vunpack.c.l.s4 1983009808
    %v48 = vunpack.c.0.s8 %v47
    %v49 = vlaneseq
    %v50 = vshrl.u32 %v49, 7
    %v51 = vsub.s32 %v48, %v50
    %v52 = vrot.slane %v23, %v51
    %v54 = vunpack.c.l.s4 1983009808
    %v55 = vunpack.c.0.s8 %v54
    %v56 = vlaneseq
    %v57 = vshrl.u32 %v56, 7
    %v58 = vsub.s32 %v55, %v57
    %v59 = vrot.slane %v45, %v58
    %v60 = vcombine.high %v52, %v52
    %v61 = vcombine.high %v59, %v59
    %v62 = vcombine.high %v24, %v24
    %v64 = vunpack.c.l.s4 1983009808
    %v65 = vunpack.c.0.s8 %v64
    %v66 = vlaneseq
    %v67 = vshrl.u32 %v66, 7
    %v68 = vsub.s32 %v65, %v67
    %v69 = vrot.slane %v24, %v68
    %v71 = vunpack.c.l.s4 1983009808
    %v72 = vunpack.c.0.s8 %v71
    %v73 = vlaneseq
    %v74 = vshrl.u32 %v73, 7
    %v75 = vsub.s32 %v72, %v74
    %v76 = vrot.slane %v62, %v75
    %v77 = vcombine.high %v69, %v69
    %v89 = vpack.c.bf16 %v35, %v35
    %v90 = vpack.c.bf16 %v43, %v43
    %v91 = vpack.c.bf16 %v42, %v42
    %v92 = vpack.c.bf16 %v44, %v44
    %v93 = vpack.c.bf16 %v52, %v52
    %v94 = vpack.c.bf16 %v60, %v60
    %v95 = vpack.c.bf16 %v59, %v59
    %v96 = vpack.c.bf16 %v61, %v61
    %v97 = vpack.c.bf16 %v69, %v69
    %v98 = vpack.c.bf16 %v77, %v77
    %v99 = vpack.c.bf16 %v76, %v76
    %v100 = vld [vmem:[%s1] sm:$0xff]
    %v101 = vld [vmem:[%s1 + $0x8] sm:$0xff]
    %v102 = vld [vmem:[%s1 + $0x10] sm:$0xff]
    %v103 = vld [vmem:[%s1 + $0x18] sm:$0xff]
    %v104 = vld [vmem:[%s1 + $0x20] sm:$0xff]
    %v105 = vld [vmem:[%s1 + $0x28] sm:$0xff]
    %v106 = vld [vmem:[%s1 + $0x30] sm:$0xff]
    %v107 = vld [vmem:[%s1 + $0x38] sm:$0xff]
    %v108 = vld [vmem:[%s1 + $0x40] sm:$0xff]
    %v109 = vld [vmem:[%s1 + $0x48] sm:$0xff]
    %v110 = vld [vmem:[%s1 + $0x50] sm:$0xff]
    %v111 = vld [vmem:[%s1 + $0x58] sm:$0xff]
    %v112 = vld [vmem:[%s1 + $0x60] sm:$0xff]
    %v113 = vld [vmem:[%s1 + $0x68] sm:$0xff]
    %v114 = vld [vmem:[%s1 + $0x70] sm:$0xff]
    %v115 = vld [vmem:[%s1 + $0x78] sm:$0xff]
    %v116 = vld [vmem:[%s1 + $0x80] sm:$0xff]
    %v117 = vld [vmem:[%s1 + $0x88] sm:$0xff]
    %v118 = vld [vmem:[%s1 + $0x90] sm:$0xff]
    %v119 = vld [vmem:[%s1 + $0x98] sm:$0xff]
    %v120 = vld [vmem:[%s1 + $0xa0] sm:$0xff]
    %v121 = vld [vmem:[%s1 + $0xa8] sm:$0xff]
    %v122 = vld [vmem:[%s1 + $0xb0] sm:$0xff]
    %v123 = vld [vmem:[%s1 + $0xb8] sm:$0xff]
    %v124 = vld [vmem:[%s1 + $0xc0] sm:$0xff]
    %v125 = vld [vmem:[%s1 + $0xc8] sm:$0xff]
    %v126 = vld [vmem:[%s1 + $0xd0] sm:$0xff]
    %v127 = vld [vmem:[%s1 + $0xd8] sm:$0xff]
    %v128 = vld [vmem:[%s1 + $0xe0] sm:$0xff]
    %v129 = vld [vmem:[%s1 + $0xe8] sm:$0xff]
    %v130 = vld [vmem:[%s1 + $0xf0] sm:$0xff]
    %v131 = vld [vmem:[%s1 + $0xf8] sm:$0xff]
    %v132 = vld [vmem:[%s1 + $0x100] sm:$0xff]
    %v133 = vld [vmem:[%s1 + $0x108] sm:$0xff]
    %v134 = vld [vmem:[%s1 + $0x110] sm:$0xff]
    %v135 = vld [vmem:[%s1 + $0x118] sm:$0xff]
    %v136 = vld [vmem:[%s1 + $0x120] sm:$0xff]
    %v137 = vld [vmem:[%s1 + $0x128] sm:$0xff]
    %v138 = vld [vmem:[%s1 + $0x130] sm:$0xff]
    %v139 = vld [vmem:[%s1 + $0x138] sm:$0xff]
    %v140 = vld [vmem:[%s1 + $0x140] sm:$0xff]
    %v141 = vld [vmem:[%s1 + $0x148] sm:$0xff]
    %v142 = vld [vmem:[%s1 + $0x150] sm:$0xff]
    %v143 = vld [vmem:[%s1 + $0x158] sm:$0xff]
    %v144 = vld [vmem:[%s1 + $0x160] sm:$0xff]
    %v145 = vld [vmem:[%s1 + $0x168] sm:$0xff]
    %v146 = vld [vmem:[%s1 + $0x170] sm:$0xff]
    %v147 = vld [vmem:[%s1 + $0x178] sm:$0xff]
    %v148 = vld [vmem:[%s1 + $0x180] sm:$0xff]
    %v149 = vld [vmem:[%s1 + $0x188] sm:$0xff]
    %v150 = vld [vmem:[%s1 + $0x190] sm:$0xff]
    %v151 = vld [vmem:[%s1 + $0x198] sm:$0xff]
    %v152 = vld [vmem:[%s1 + $0x1a0] sm:$0xff]
    %v153 = vld [vmem:[%s1 + $0x1a8] sm:$0xff]
    %v154 = vld [vmem:[%s1 + $0x1b0] sm:$0xff]
    %v155 = vld [vmem:[%s1 + $0x1b8] sm:$0xff]
    %v156 = vld [vmem:[%s1 + $0x1c0] sm:$0xff]
    %v157 = vld [vmem:[%s1 + $0x1c8] sm:$0xff]
    %v158 = vld [vmem:[%s1 + $0x1d0] sm:$0xff]
    %v159 = vld [vmem:[%s1 + $0x1d8] sm:$0xff]
    %v160 = vld [vmem:[%s1 + $0x1e0] sm:$0xff]
    %v161 = vld [vmem:[%s1 + $0x1e8] sm:$0xff]
    %v162 = vld [vmem:[%s1 + $0x1f0] sm:$0xff]
    %v163 = vld [vmem:[%s1 + $0x1f8] sm:$0xff]
    %v164 = vld [vmem:[%s1 + $0x200] sm:$0xff]
    %v165 = vld [vmem:[%s1 + $0x208] sm:$0xff]
    %v166 = vld [vmem:[%s1 + $0x210] sm:$0xff]
    %v167 = vld [vmem:[%s1 + $0x218] sm:$0xff]
    %v168 = vld [vmem:[%s1 + $0x220] sm:$0xff]
    %v169 = vld [vmem:[%s1 + $0x228] sm:$0xff]
    %v170 = vld [vmem:[%s1 + $0x230] sm:$0xff]
    %v171 = vld [vmem:[%s1 + $0x238] sm:$0xff]
    %v172 = vld [vmem:[%s1 + $0x240] sm:$0xff]
    %v173 = vld [vmem:[%s1 + $0x248] sm:$0xff]
    %v174 = vld [vmem:[%s1 + $0x250] sm:$0xff]
    %v175 = vld [vmem:[%s1 + $0x258] sm:$0xff]
    %v176 = vld [vmem:[%s1 + $0x260] sm:$0xff]
    %v177 = vld [vmem:[%s1 + $0x268] sm:$0xff]
    %v178 = vld [vmem:[%s1 + $0x270] sm:$0xff]
    %v179 = vld [vmem:[%s1 + $0x278] sm:$0xff]
    %v180 = vld [vmem:[%s1 + $0x280] sm:$0xff]
    %v181 = vld [vmem:[%s1 + $0x288] sm:$0xff]
    %v182 = vld [vmem:[%s1 + $0x290] sm:$0xff]
    %v183 = vld [vmem:[%s1 + $0x298] sm:$0xff]
    %v184 = vld [vmem:[%s1 + $0x2a0] sm:$0xff]
    %v185 = vld [vmem:[%s1 + $0x2a8] sm:$0xff]
    %v186 = vld [vmem:[%s1 + $0x2b0] sm:$0xff]
    %v187 = vld [vmem:[%s1 + $0x2b8] sm:$0xff]
    %v188 = vld [vmem:[%s1 + $0x2c0] sm:$0xff]
    %v189 = vld [vmem:[%s1 + $0x2c8] sm:$0xff]
    %v190 = vld [vmem:[%s1 + $0x2d0] sm:$0xff]
    %v191 = vld [vmem:[%s1 + $0x2d8] sm:$0xff]
    %v192 = vld [vmem:[%s1 + $0x2e0] sm:$0xff]
    %v193 = vld [vmem:[%s1 + $0x2e8] sm:$0xff]
    %v194 = vld [vmem:[%s1 + $0x2f0] sm:$0xff]
    %v195 = vld [vmem:[%s1 + $0x2f8] sm:$0xff]
    %v196 = vld [vmem:[%s1 + $0x300] sm:$0xff]
    %v197 = vld [vmem:[%s1 + $0x308] sm:$0xff]
    %v198 = vld [vmem:[%s1 + $0x310] sm:$0xff]
    %v199 = vld [vmem:[%s1 + $0x318] sm:$0xff]
    %v200 = vld [vmem:[%s1 + $0x320] sm:$0xff]
    %v201 = vld [vmem:[%s1 + $0x328] sm:$0xff]
    %v202 = vld [vmem:[%s1 + $0x330] sm:$0xff]
    %v203 = vld [vmem:[%s1 + $0x338] sm:$0xff]
    %v204 = vld [vmem:[%s1 + $0x340] sm:$0xff]
    %v205 = vld [vmem:[%s1 + $0x348] sm:$0xff]
    %v206 = vld [vmem:[%s1 + $0x350] sm:$0xff]
    %v207 = vld [vmem:[%s1 + $0x358] sm:$0xff]
    %v208 = vld [vmem:[%s1 + $0x360] sm:$0xff]
    %v209 = vld [vmem:[%s1 + $0x368] sm:$0xff]
    %v210 = vld [vmem:[%s1 + $0x370] sm:$0xff]
    %v211 = vld [vmem:[%s1 + $0x378] sm:$0xff]
    %v212 = vld [vmem:[%s1 + $0x380] sm:$0xff]
    %v213 = vld [vmem:[%s1 + $0x388] sm:$0xff]
    %v214 = vld [vmem:[%s1 + $0x390] sm:$0xff]
    %v215 = vld [vmem:[%s1 + $0x398] sm:$0xff]
    %v216 = vld [vmem:[%s1 + $0x3a0] sm:$0xff]
    %v217 = vld [vmem:[%s1 + $0x3a8] sm:$0xff]
    %v218 = vld [vmem:[%s1 + $0x3b0] sm:$0xff]
    %v219 = vld [vmem:[%s1 + $0x3b8] sm:$0xff]
    %v220 = vld [vmem:[%s1 + $0x3c0] sm:$0xff]
    %v221 = vld [vmem:[%s1 + $0x3c8] sm:$0xff]
    %v222 = vld [vmem:[%s1 + $0x3d0] sm:$0xff]
    %v223 = vld [vmem:[%s1 + $0x3d8] sm:$0xff]
    %v224 = vld [vmem:[%s1 + $0x3e0] sm:$0xff]
    %v225 = vld [vmem:[%s1 + $0x3e8] sm:$0xff]
    %v226 = vld [vmem:[%s1 + $0x3f0] sm:$0xff]
    %v227 = vld [vmem:[%s1 + $0x3f8] sm:$0xff]
    %v228 = vld [vmem:[%s1 + $0x400] sm:$0xff]
    %v229 = vld [vmem:[%s1 + $0x408] sm:$0xff]
    %v230 = vld [vmem:[%s1 + $0x410] sm:$0xff]
    %v231 = vld [vmem:[%s1 + $0x418] sm:$0xff]
    %v232 = vld [vmem:[%s1 + $0x420] sm:$0xff]
    %v233 = vld [vmem:[%s1 + $0x428] sm:$0xff]
    %v234 = vld [vmem:[%s1 + $0x430] sm:$0xff]
    %v235 = vld [vmem:[%s1 + $0x438] sm:$0xff]
    %v236 = vld [vmem:[%s1 + $0x440] sm:$0xff]
    %v237 = vld [vmem:[%s1 + $0x448] sm:$0xff]
    %v238 = vld [vmem:[%s1 + $0x450] sm:$0xff]
    %v239 = vld [vmem:[%s1 + $0x458] sm:$0xff]
    %v240 = vld [vmem:[%s1 + $0x460] sm:$0xff]
    %v241 = vld [vmem:[%s1 + $0x468] sm:$0xff]
    %v242 = vld [vmem:[%s1 + $0x470] sm:$0xff]
    %v243 = vld [vmem:[%s1 + $0x478] sm:$0xff]
    %v244 = vld [vmem:[%s1 + $0x480] sm:$0xff]
    %v245 = vld [vmem:[%s1 + $0x488] sm:$0xff]
    %v246 = vld [vmem:[%s1 + $0x490] sm:$0xff]
    %v247 = vld [vmem:[%s1 + $0x498] sm:$0xff]
    %v248 = vld [vmem:[%s1 + $0x4a0] sm:$0xff]
    %v249 = vld [vmem:[%s1 + $0x4a8] sm:$0xff]
    %v250 = vld [vmem:[%s1 + $0x4b0] sm:$0xff]
    %v251 = vld [vmem:[%s1 + $0x4b8] sm:$0xff]
    %v252 = vld [vmem:[%s1 + $0x4c0] sm:$0xff]
    %v253 = vld [vmem:[%s1 + $0x4c8] sm:$0xff]
    %v254 = vld [vmem:[%s1 + $0x4d0] sm:$0xff]
    %v255 = vld [vmem:[%s1 + $0x4d8] sm:$0xff]
    %v256 = vld [vmem:[%s1 + $0x4e0] sm:$0xff]
    %v257 = vld [vmem:[%s1 + $0x4e8] sm:$0xff]
    %v258 = vld [vmem:[%s1 + $0x4f0] sm:$0xff]
    %v259 = vld [vmem:[%s1 + $0x4f8] sm:$0xff]
    %v260 = vld [vmem:[%s1 + $0x500] sm:$0xff]
    %v261 = vld [vmem:[%s1 + $0x508] sm:$0xff]
    %v262 = vld [vmem:[%s1 + $0x510] sm:$0xff]
    %v263 = vld [vmem:[%s1 + $0x518] sm:$0xff]
    %v264 = vld [vmem:[%s1 + $0x520] sm:$0xff]
    %v265 = vld [vmem:[%s1 + $0x528] sm:$0xff]
    %v266 = vld [vmem:[%s1 + $0x530] sm:$0xff]
    %v267 = vld [vmem:[%s1 + $0x538] sm:$0xff]
    %v268 = vld [vmem:[%s1 + $0x540] sm:$0xff]
    %v269 = vld [vmem:[%s1 + $0x548] sm:$0xff]
    %v270 = vld [vmem:[%s1 + $0x550] sm:$0xff]
    %v271 = vld [vmem:[%s1 + $0x558] sm:$0xff]
    %v272 = vld [vmem:[%s1 + $0x560] sm:$0xff]
    %v273 = vld [vmem:[%s1 + $0x568] sm:$0xff]
    %v274 = vld [vmem:[%s1 + $0x570] sm:$0xff]
    %v275 = vld [vmem:[%s2] sm:$0x3]
    %v277 = vlaneseq
    %v278 = vshrl.u32 %v277, 7
    %v279 = vsub.s32 0, %v278
    %v280 = vrot.slane %v275, %v279
    %v281 = vlaneseq
    %v282 = vshrl.u32 %v281, 7
    %v283 = vsub.s32 1, %v282
    %v284 = vrot.slane %v275, %v283
    %v462 = vunpack.c.l.b16 %v100
    %v463 = vunpack.c.h.b16 %v100
    %v464 = vunpack.c.l.b16 %v101
    %v465 = vunpack.c.h.b16 %v101
    %v466 = vunpack.c.l.b16 %v102
    %v467 = vunpack.c.h.b16 %v102
    %v468 = vunpack.c.l.b16 %v103
    %v469 = vunpack.c.h.b16 %v103
    %v470 = vunpack.c.l.b16 %v104
    %v471 = vunpack.c.h.b16 %v104
    %v472 = vunpack.c.l.b16 %v105
    %v473 = vunpack.c.h.b16 %v105
    %v474 = vunpack.c.l.b16 %v106
    %v475 = vunpack.c.h.b16 %v106
    %v476 = vunpack.c.l.b16 %v107
    %v477 = vunpack.c.h.b16 %v107
    %v478 = vunpack.c.l.b16 %v108
    %v479 = vunpack.c.h.b16 %v108
    %v480 = vunpack.c.l.b16 %v109
    %v481 = vunpack.c.h.b16 %v109
    %v482 = vunpack.c.l.b16 %v110
    %v483 = vunpack.c.h.b16 %v110
    %v484 = vunpack.c.l.b16 %v111
    %v485 = vunpack.c.h.b16 %v111
    %v486 = vunpack.c.l.b16 %v112
    %v487 = vunpack.c.h.b16 %v112
    %v488 = vunpack.c.l.b16 %v113
    %v489 = vunpack.c.h.b16 %v113
    %v490 = vunpack.c.l.b16 %v114
    %v491 = vunpack.c.h.b16 %v114
    %v492 = vunpack.c.l.b16 %v115
    %v493 = vunpack.c.h.b16 %v115
    %v494 = vunpack.c.l.b16 %v116
    %v495 = vunpack.c.h.b16 %v116
    %v496 = vunpack.c.l.b16 %v117
    %v497 = vunpack.c.h.b16 %v117
    %v498 = vunpack.c.l.b16 %v118
    %v499 = vunpack.c.h.b16 %v118
    %v500 = vunpack.c.l.b16 %v119
    %v501 = vunpack.c.h.b16 %v119
    %v502 = vunpack.c.l.b16 %v120
    %v503 = vunpack.c.h.b16 %v120
    %v504 = vunpack.c.l.b16 %v121
    %v505 = vunpack.c.h.b16 %v121
    %v506 = vunpack.c.l.b16 %v122
    %v507 = vunpack.c.h.b16 %v122
    %v508 = vunpack.c.l.b16 %v123
    %v509 = vunpack.c.h.b16 %v123
    %v510 = vunpack.c.l.b16 %v124
    %v511 = vunpack.c.h.b16 %v124
    %v512 = vunpack.c.l.b16 %v125
    %v513 = vunpack.c.h.b16 %v125
    %v514 = vunpack.c.l.b16 %v126
    %v515 = vunpack.c.h.b16 %v126
    %v516 = vunpack.c.l.b16 %v127
    %v517 = vunpack.c.h.b16 %v127
    %v518 = vunpack.c.l.b16 %v128
    %v519 = vunpack.c.h.b16 %v128
    %v520 = vunpack.c.l.b16 %v129
    %v521 = vunpack.c.h.b16 %v129
    %v522 = vunpack.c.l.b16 %v130
    %v523 = vunpack.c.h.b16 %v130
    %v524 = vunpack.c.l.b16 %v131
    %v525 = vunpack.c.h.b16 %v131
    %v526 = vunpack.c.l.b16 %v132
    %v527 = vunpack.c.h.b16 %v132
    %v528 = vunpack.c.l.b16 %v133
    %v529 = vunpack.c.h.b16 %v133
    %v530 = vunpack.c.l.b16 %v134
    %v531 = vunpack.c.h.b16 %v134
    %v532 = vunpack.c.l.b16 %v135
    %v533 = vunpack.c.h.b16 %v135
    %v534 = vunpack.c.l.b16 %v136
    %v535 = vunpack.c.h.b16 %v136
    %v536 = vunpack.c.l.b16 %v137
    %v537 = vunpack.c.h.b16 %v137
    %v538 = vunpack.c.l.b16 %v138
    %v539 = vunpack.c.h.b16 %v138
    %v540 = vunpack.c.l.b16 %v139
    %v541 = vunpack.c.h.b16 %v139
    %v542 = vunpack.c.l.b16 %v140
    %v543 = vunpack.c.h.b16 %v140
    %v544 = vunpack.c.l.b16 %v141
    %v545 = vunpack.c.h.b16 %v141
    %v546 = vunpack.c.l.b16 %v142
    %v547 = vunpack.c.h.b16 %v142
    %v548 = vunpack.c.l.b16 %v143
    %v549 = vunpack.c.h.b16 %v143
    %v550 = vunpack.c.l.b16 %v144
    %v551 = vunpack.c.h.b16 %v144
    %v552 = vunpack.c.l.b16 %v145
    %v553 = vunpack.c.h.b16 %v145
    %v554 = vunpack.c.l.b16 %v146
    %v555 = vunpack.c.h.b16 %v146
    %v556 = vunpack.c.l.b16 %v147
    %v557 = vunpack.c.h.b16 %v147
    %v558 = vunpack.c.l.b16 %v148
    %v559 = vunpack.c.h.b16 %v148
    %v560 = vunpack.c.l.b16 %v149
    %v561 = vunpack.c.h.b16 %v149
    %v562 = vunpack.c.l.b16 %v150
    %v563 = vunpack.c.h.b16 %v150
    %v564 = vunpack.c.l.b16 %v151
    %v565 = vunpack.c.h.b16 %v151
    %v566 = vunpack.c.l.b16 %v152
    %v567 = vunpack.c.h.b16 %v152
    %v568 = vunpack.c.l.b16 %v153
    %v569 = vunpack.c.h.b16 %v153
    %v570 = vunpack.c.l.b16 %v154
    %v571 = vunpack.c.h.b16 %v154
    %v572 = vunpack.c.l.b16 %v155
    %v573 = vunpack.c.h.b16 %v155
    %v574 = vunpack.c.l.b16 %v156
    %v575 = vunpack.c.h.b16 %v156
    %v576 = vunpack.c.l.b16 %v157
    %v577 = vunpack.c.h.b16 %v157
    %v578 = vunpack.c.l.b16 %v158
    %v579 = vunpack.c.h.b16 %v158
    %v580 = vunpack.c.l.b16 %v159
    %v581 = vunpack.c.h.b16 %v159
    %v582 = vunpack.c.l.b16 %v160
    %v583 = vunpack.c.h.b16 %v160
    %v584 = vunpack.c.l.b16 %v161
    %v585 = vunpack.c.h.b16 %v161
    %v586 = vunpack.c.l.b16 %v162
    %v587 = vunpack.c.h.b16 %v162
    %v588 = vunpack.c.l.b16 %v163
    %v589 = vunpack.c.h.b16 %v163
    %v590 = vunpack.c.l.b16 %v164
    %v591 = vunpack.c.h.b16 %v164
    %v592 = vunpack.c.l.b16 %v165
    %v593 = vunpack.c.h.b16 %v165
    %v594 = vunpack.c.l.b16 %v166
    %v595 = vunpack.c.h.b16 %v166
    %v596 = vunpack.c.l.b16 %v167
    %v597 = vunpack.c.h.b16 %v167
    %v598 = vunpack.c.l.b16 %v168
    %v599 = vunpack.c.h.b16 %v168
    %v600 = vunpack.c.l.b16 %v169
    %v601 = vunpack.c.h.b16 %v169
    %v602 = vunpack.c.l.b16 %v170
    %v603 = vunpack.c.h.b16 %v170
    %v604 = vunpack.c.l.b16 %v171
    %v605 = vunpack.c.h.b16 %v171
    %v606 = vunpack.c.l.b16 %v172
    %v607 = vunpack.c.h.b16 %v172
    %v608 = vunpack.c.l.b16 %v173
    %v609 = vunpack.c.h.b16 %v173
    %v610 = vunpack.c.l.b16 %v174
    %v611 = vunpack.c.h.b16 %v174
    %v612 = vunpack.c.l.b16 %v175
    %v613 = vunpack.c.h.b16 %v175
    %v614 = vunpack.c.l.b16 %v176
    %v615 = vunpack.c.h.b16 %v176
    %v616 = vunpack.c.l.b16 %v177
    %v617 = vunpack.c.h.b16 %v177
    %v618 = vunpack.c.l.b16 %v178
    %v619 = vunpack.c.h.b16 %v178
    %v620 = vunpack.c.l.b16 %v179
    %v621 = vunpack.c.h.b16 %v179
    %v622 = vunpack.c.l.b16 %v180
    %v623 = vunpack.c.h.b16 %v180
    %v624 = vunpack.c.l.b16 %v181
    %v625 = vunpack.c.h.b16 %v181
    %v626 = vunpack.c.l.b16 %v182
    %v627 = vunpack.c.h.b16 %v182
    %v628 = vunpack.c.l.b16 %v183
    %v629 = vunpack.c.h.b16 %v183
    %v630 = vunpack.c.l.b16 %v184
    %v631 = vunpack.c.h.b16 %v184
    %v632 = vunpack.c.l.b16 %v185
    %v633 = vunpack.c.h.b16 %v185
    %v634 = vunpack.c.l.b16 %v186
    %v635 = vunpack.c.h.b16 %v186
    %v636 = vunpack.c.l.b16 %v187
    %v637 = vunpack.c.h.b16 %v187
    %v638 = vunpack.c.l.b16 %v188
    %v639 = vunpack.c.h.b16 %v188
    %v640 = vunpack.c.l.b16 %v189
    %v641 = vunpack.c.h.b16 %v189
    %v642 = vunpack.c.l.b16 %v190
    %v643 = vunpack.c.h.b16 %v190
    %v644 = vunpack.c.l.b16 %v191
    %v645 = vunpack.c.h.b16 %v191
    %v646 = vunpack.c.l.b16 %v192
    %v647 = vunpack.c.h.b16 %v192
    %v648 = vunpack.c.l.b16 %v193
    %v649 = vunpack.c.h.b16 %v193
    %v650 = vunpack.c.l.b16 %v194
    %v651 = vunpack.c.h.b16 %v194
    %v652 = vunpack.c.l.b16 %v195
    %v653 = vunpack.c.h.b16 %v195
    %v654 = vunpack.c.l.b16 %v196
    %v655 = vunpack.c.h.b16 %v196
    %v656 = vunpack.c.l.b16 %v197
    %v657 = vunpack.c.h.b16 %v197
    %v658 = vunpack.c.l.b16 %v198
    %v659 = vunpack.c.h.b16 %v198
    %v660 = vunpack.c.l.b16 %v199
    %v661 = vunpack.c.h.b16 %v199
    %v662 = vunpack.c.l.b16 %v200
    %v663 = vunpack.c.h.b16 %v200
    %v664 = vunpack.c.l.b16 %v201
    %v665 = vunpack.c.h.b16 %v201
    %v666 = vunpack.c.l.b16 %v202
    %v667 = vunpack.c.h.b16 %v202
    %v668 = vunpack.c.l.b16 %v203
    %v669 = vunpack.c.h.b16 %v203
    %v670 = vunpack.c.l.b16 %v204
    %v671 = vunpack.c.h.b16 %v204
    %v672 = vunpack.c.l.b16 %v205
    %v673 = vunpack.c.h.b16 %v205
    %v674 = vunpack.c.l.b16 %v206
    %v675 = vunpack.c.h.b16 %v206
    %v676 = vunpack.c.l.b16 %v207
    %v677 = vunpack.c.h.b16 %v207
    %v678 = vunpack.c.l.b16 %v208
    %v679 = vunpack.c.h.b16 %v208
    %v680 = vunpack.c.l.b16 %v209
    %v681 = vunpack.c.h.b16 %v209
    %v682 = vunpack.c.l.b16 %v210
    %v683 = vunpack.c.h.b16 %v210
    %v684 = vunpack.c.l.b16 %v211
    %v685 = vunpack.c.h.b16 %v211
    %v686 = vunpack.c.l.b16 %v212
    %v687 = vunpack.c.h.b16 %v212
    %v688 = vunpack.c.l.b16 %v213
    %v689 = vunpack.c.h.b16 %v213
    %v690 = vunpack.c.l.b16 %v214
    %v691 = vunpack.c.h.b16 %v214
    %v692 = vunpack.c.l.b16 %v215
    %v693 = vunpack.c.h.b16 %v215
    %v694 = vunpack.c.l.b16 %v216
    %v695 = vunpack.c.h.b16 %v216
    %v696 = vunpack.c.l.b16 %v217
    %v697 = vunpack.c.h.b16 %v217
    %v698 = vunpack.c.l.b16 %v218
    %v699 = vunpack.c.h.b16 %v218
    %v700 = vunpack.c.l.b16 %v219
    %v701 = vunpack.c.h.b16 %v219
    %v702 = vunpack.c.l.b16 %v220
    %v703 = vunpack.c.h.b16 %v220
    %v704 = vunpack.c.l.b16 %v221
    %v705 = vunpack.c.h.b16 %v221
    %v706 = vunpack.c.l.b16 %v222
    %v707 = vunpack.c.h.b16 %v222
    %v708 = vunpack.c.l.b16 %v223
    %v709 = vunpack.c.h.b16 %v223
    %v710 = vunpack.c.l.b16 %v224
    %v711 = vunpack.c.h.b16 %v224
    %v712 = vunpack.c.l.b16 %v225
    %v713 = vunpack.c.h.b16 %v225
    %v714 = vunpack.c.l.b16 %v226
    %v715 = vunpack.c.h.b16 %v226
    %v716 = vunpack.c.l.b16 %v227
    %v717 = vunpack.c.h.b16 %v227
    %v718 = vunpack.c.l.b16 %v228
    %v719 = vunpack.c.h.b16 %v228
    %v720 = vunpack.c.l.b16 %v229
    %v721 = vunpack.c.h.b16 %v229
    %v722 = vunpack.c.l.b16 %v230
    %v723 = vunpack.c.h.b16 %v230
    %v724 = vunpack.c.l.b16 %v231
    %v725 = vunpack.c.h.b16 %v231
    %v726 = vunpack.c.l.b16 %v232
    %v727 = vunpack.c.h.b16 %v232
    %v728 = vunpack.c.l.b16 %v233
    %v729 = vunpack.c.h.b16 %v233
    %v730 = vunpack.c.l.b16 %v234
    %v731 = vunpack.c.h.b16 %v234
    %v732 = vunpack.c.l.b16 %v235
    %v733 = vunpack.c.h.b16 %v235
    %v734 = vunpack.c.l.b16 %v236
    %v735 = vunpack.c.h.b16 %v236
    %v736 = vunpack.c.l.b16 %v237
    %v737 = vunpack.c.h.b16 %v237
    %v738 = vunpack.c.l.b16 %v238
    %v739 = vunpack.c.h.b16 %v238
    %v740 = vunpack.c.l.b16 %v239
    %v741 = vunpack.c.h.b16 %v239
    %v742 = vunpack.c.l.b16 %v240
    %v743 = vunpack.c.h.b16 %v240
    %v744 = vunpack.c.l.b16 %v241
    %v745 = vunpack.c.h.b16 %v241
    %v746 = vunpack.c.l.b16 %v242
    %v747 = vunpack.c.h.b16 %v242
    %v748 = vunpack.c.l.b16 %v243
    %v749 = vunpack.c.h.b16 %v243
    %v750 = vunpack.c.l.b16 %v244
    %v751 = vunpack.c.h.b16 %v244
    %v752 = vunpack.c.l.b16 %v245
    %v753 = vunpack.c.h.b16 %v245
    %v754 = vunpack.c.l.b16 %v246
    %v755 = vunpack.c.h.b16 %v246
    %v756 = vunpack.c.l.b16 %v247
    %v757 = vunpack.c.h.b16 %v247
    %v758 = vunpack.c.l.b16 %v248
    %v759 = vunpack.c.h.b16 %v248
    %v760 = vunpack.c.l.b16 %v249
    %v761 = vunpack.c.h.b16 %v249
    %v762 = vunpack.c.l.b16 %v250
    %v763 = vunpack.c.h.b16 %v250
    %v764 = vunpack.c.l.b16 %v251
    %v765 = vunpack.c.h.b16 %v251
    %v766 = vunpack.c.l.b16 %v252
    %v767 = vunpack.c.h.b16 %v252
    %v768 = vunpack.c.l.b16 %v253
    %v769 = vunpack.c.h.b16 %v253
    %v770 = vunpack.c.l.b16 %v254
    %v771 = vunpack.c.h.b16 %v254
    %v772 = vunpack.c.l.b16 %v255
    %v773 = vunpack.c.h.b16 %v255
    %v774 = vunpack.c.l.b16 %v256
    %v775 = vunpack.c.h.b16 %v256
    %v776 = vunpack.c.l.b16 %v257
    %v777 = vunpack.c.h.b16 %v257
    %v778 = vunpack.c.l.b16 %v258
    %v779 = vunpack.c.h.b16 %v258
    %v780 = vunpack.c.l.b16 %v259
    %v781 = vunpack.c.h.b16 %v259
    %v782 = vunpack.c.l.b16 %v260
    %v783 = vunpack.c.h.b16 %v260
    %v784 = vunpack.c.l.b16 %v261
    %v785 = vunpack.c.h.b16 %v261
    %v786 = vunpack.c.l.b16 %v262
    %v787 = vunpack.c.h.b16 %v262
    %v788 = vunpack.c.l.b16 %v263
    %v789 = vunpack.c.h.b16 %v263
    %v790 = vunpack.c.l.b16 %v264
    %v791 = vunpack.c.h.b16 %v264
    %v792 = vunpack.c.l.b16 %v265
    %v793 = vunpack.c.h.b16 %v265
    %v794 = vunpack.c.l.b16 %v266
    %v795 = vunpack.c.h.b16 %v266
    %v796 = vunpack.c.l.b16 %v267
    %v797 = vunpack.c.h.b16 %v267
    %v798 = vunpack.c.l.b16 %v268
    %v799 = vunpack.c.h.b16 %v268
    %v800 = vunpack.c.l.b16 %v269
    %v801 = vunpack.c.h.b16 %v269
    %v802 = vunpack.c.l.b16 %v270
    %v803 = vunpack.c.h.b16 %v270
    %v804 = vunpack.c.l.b16 %v271
    %v805 = vunpack.c.h.b16 %v271
    %v806 = vunpack.c.l.b16 %v272
    %v807 = vunpack.c.h.b16 %v272
    %v808 = vunpack.c.l.b16 %v273
    %v809 = vunpack.c.h.b16 %v273
    %v810 = vunpack.c.l.b16 %v274
    %v811 = vunpack.c.h.b16 %v274
    %v812 = vpack.c.b16 %v464, %v462
    %v813 = vpack.c.b16 %v465, %v463
    %v814 = vpack.c.b16 %v468, %v466
    %v815 = vpack.c.b16 %v469, %v467
    %v816 = vpack.c.b16 %v472, %v470
    %v817 = vpack.c.b16 %v473, %v471
    %v818 = vpack.c.b16 %v476, %v474
    %v819 = vpack.c.b16 %v477, %v475
    %v820 = vpack.c.b16 %v480, %v478
    %v821 = vpack.c.b16 %v481, %v479
    %v822 = vpack.c.b16 %v484, %v482
    %v823 = vpack.c.b16 %v485, %v483
    %v824 = vpack.c.b16 %v488, %v486
    %v825 = vpack.c.b16 %v489, %v487
    %v826 = vpack.c.b16 %v492, %v490
    %v827 = vpack.c.b16 %v493, %v491
    %v828 = vpack.c.b16 %v496, %v494
    %v829 = vpack.c.b16 %v497, %v495
    %v830 = vpack.c.b16 %v500, %v498
    %v831 = vpack.c.b16 %v501, %v499
    %v832 = vpack.c.b16 %v504, %v502
    %v833 = vpack.c.b16 %v505, %v503
    %v834 = vpack.c.b16 %v508, %v506
    %v835 = vpack.c.b16 %v509, %v507
    %v836 = vpack.c.b16 %v512, %v510
    %v837 = vpack.c.b16 %v513, %v511
    %v838 = vpack.c.b16 %v516, %v514
    %v839 = vpack.c.b16 %v517, %v515
    %v840 = vpack.c.b16 %v520, %v518
    %v841 = vpack.c.b16 %v521, %v519
    %v842 = vpack.c.b16 %v524, %v522
    %v843 = vpack.c.b16 %v525, %v523
    %v844 = vpack.c.b16 %v528, %v526
    %v845 = vpack.c.b16 %v529, %v527
    %v846 = vpack.c.b16 %v532, %v530
    %v847 = vpack.c.b16 %v533, %v531
    %v848 = vpack.c.b16 %v536, %v534
    %v849 = vpack.c.b16 %v537, %v535
    %v850 = vpack.c.b16 %v540, %v538
    %v851 = vpack.c.b16 %v541, %v539
    %v852 = vpack.c.b16 %v544, %v542
    %v853 = vpack.c.b16 %v545, %v543
    %v854 = vpack.c.b16 %v548, %v546
    %v855 = vpack.c.b16 %v549, %v547
    %v856 = vpack.c.b16 %v552, %v550
    %v857 = vpack.c.b16 %v553, %v551
    %v858 = vpack.c.b16 %v556, %v554
    %v859 = vpack.c.b16 %v557, %v555
    %v860 = vpack.c.b16 %v560, %v558
    %v861 = vpack.c.b16 %v561, %v559
    %v862 = vpack.c.b16 %v564, %v562
    %v863 = vpack.c.b16 %v565, %v563
    %v864 = vpack.c.b16 %v568, %v566
    %v865 = vpack.c.b16 %v569, %v567
    %v866 = vpack.c.b16 %v572, %v570
    %v867 = vpack.c.b16 %v573, %v571
    %v868 = vpack.c.b16 %v576, %v574
    %v869 = vpack.c.b16 %v577, %v575
    %v870 = vpack.c.b16 %v580, %v578
    %v871 = vpack.c.b16 %v581, %v579
    %v872 = vpack.c.b16 %v584, %v582
    %v873 = vpack.c.b16 %v585, %v583
    %v874 = vpack.c.b16 %v588, %v586
    %v875 = vpack.c.b16 %v589, %v587
    %v876 = vpack.c.b16 %v592, %v590
    %v877 = vpack.c.b16 %v593, %v591
    %v878 = vpack.c.b16 %v596, %v594
    %v879 = vpack.c.b16 %v597, %v595
    %v880 = vpack.c.b16 %v600, %v598
    %v881 = vpack.c.b16 %v601, %v599
    %v882 = vpack.c.b16 %v604, %v602
    %v883 = vpack.c.b16 %v605, %v603
    %v884 = vpack.c.b16 %v608, %v606
    %v885 = vpack.c.b16 %v609, %v607
    %v886 = vpack.c.b16 %v612, %v610
    %v887 = vpack.c.b16 %v613, %v611
    %v888 = vpack.c.b16 %v616, %v614
    %v889 = vpack.c.b16 %v617, %v615
    %v890 = vpack.c.b16 %v620, %v618
    %v891 = vpack.c.b16 %v621, %v619
    %v892 = vpack.c.b16 %v624, %v622
    %v893 = vpack.c.b16 %v625, %v623
    %v894 = vpack.c.b16 %v628, %v626
    %v895 = vpack.c.b16 %v629, %v627
    %v896 = vpack.c.b16 %v632, %v630
    %v897 = vpack.c.b16 %v633, %v631
    %v898 = vpack.c.b16 %v636, %v634
    %v899 = vpack.c.b16 %v637, %v635
    %v900 = vpack.c.b16 %v640, %v638
    %v901 = vpack.c.b16 %v641, %v639
    %v902 = vpack.c.b16 %v644, %v642
    %v903 = vpack.c.b16 %v645, %v643
    %v904 = vpack.c.b16 %v648, %v646
    %v905 = vpack.c.b16 %v649, %v647
    %v906 = vpack.c.b16 %v652, %v650
    %v907 = vpack.c.b16 %v653, %v651
    %v908 = vpack.c.b16 %v656, %v654
    %v909 = vpack.c.b16 %v657, %v655
    %v910 = vpack.c.b16 %v660, %v658
    %v911 = vpack.c.b16 %v661, %v659
    %v912 = vpack.c.b16 %v664, %v662
    %v913 = vpack.c.b16 %v665, %v663
    %v914 = vpack.c.b16 %v668, %v666
    %v915 = vpack.c.b16 %v669, %v667
    %v916 = vpack.c.b16 %v672, %v670
    %v917 = vpack.c.b16 %v673, %v671
    %v918 = vpack.c.b16 %v676, %v674
    %v919 = vpack.c.b16 %v677, %v675
    %v920 = vpack.c.b16 %v680, %v678
    %v921 = vpack.c.b16 %v681, %v679
    %v922 = vpack.c.b16 %v684, %v682
    %v923 = vpack.c.b16 %v685, %v683
    %v924 = vpack.c.b16 %v688, %v686
    %v925 = vpack.c.b16 %v689, %v687
    %v926 = vpack.c.b16 %v692, %v690
    %v927 = vpack.c.b16 %v693, %v691
    %v928 = vpack.c.b16 %v696, %v694
    %v929 = vpack.c.b16 %v697, %v695
    %v930 = vpack.c.b16 %v700, %v698
    %v931 = vpack.c.b16 %v701, %v699
    %v932 = vpack.c.b16 %v704, %v702
    %v933 = vpack.c.b16 %v705, %v703
    %v934 = vpack.c.b16 %v708, %v706
    %v935 = vpack.c.b16 %v709, %v707
    %v936 = vpack.c.b16 %v712, %v710
    %v937 = vpack.c.b16 %v713, %v711
    %v938 = vpack.c.b16 %v716, %v714
    %v939 = vpack.c.b16 %v717, %v715
    %v940 = vpack.c.b16 %v720, %v718
    %v941 = vpack.c.b16 %v721, %v719
    %v942 = vpack.c.b16 %v724, %v722
    %v943 = vpack.c.b16 %v725, %v723
    %v944 = vpack.c.b16 %v728, %v726
    %v945 = vpack.c.b16 %v729, %v727
    %v946 = vpack.c.b16 %v732, %v730
    %v947 = vpack.c.b16 %v733, %v731
    %v948 = vpack.c.b16 %v736, %v734
    %v949 = vpack.c.b16 %v737, %v735
    %v950 = vpack.c.b16 %v740, %v738
    %v951 = vpack.c.b16 %v741, %v739
    %v952 = vpack.c.b16 %v744, %v742
    %v953 = vpack.c.b16 %v745, %v743
    %v954 = vpack.c.b16 %v748, %v746
    %v955 = vpack.c.b16 %v749, %v747
    %v956 = vpack.c.b16 %v752, %v750
    %v957 = vpack.c.b16 %v753, %v751
    %v958 = vpack.c.b16 %v756, %v754
    %v959 = vpack.c.b16 %v757, %v755
    %v960 = vpack.c.b16 %v760, %v758
    %v961 = vpack.c.b16 %v761, %v759
    %v962 = vpack.c.b16 %v764, %v762
    %v963 = vpack.c.b16 %v765, %v763
    %v964 = vpack.c.b16 %v768, %v766
    %v965 = vpack.c.b16 %v769, %v767
    %v966 = vpack.c.b16 %v772, %v770
    %v967 = vpack.c.b16 %v773, %v771
    %v968 = vpack.c.b16 %v776, %v774
    %v969 = vpack.c.b16 %v777, %v775
    %v970 = vpack.c.b16 %v780, %v778
    %v971 = vpack.c.b16 %v781, %v779
    %v972 = vpack.c.b16 %v784, %v782
    %v973 = vpack.c.b16 %v785, %v783
    %v974 = vpack.c.b16 %v788, %v786
    %v975 = vpack.c.b16 %v789, %v787
    %v976 = vpack.c.b16 %v792, %v790
    %v977 = vpack.c.b16 %v793, %v791
    %v978 = vpack.c.b16 %v796, %v794
    %v979 = vpack.c.b16 %v797, %v795
    %v980 = vpack.c.b16 %v800, %v798
    %v981 = vpack.c.b16 %v801, %v799
    %v982 = vpack.c.b16 %v804, %v802
    %v983 = vpack.c.b16 %v805, %v803
    %v984 = vpack.c.b16 %v808, %v806
    %v985 = vpack.c.b16 %v809, %v807
    %v986 = vpack.c.b16 %v810, %v810
    %v987 = vpack.c.b16 %v811, %v811
    %vm1162 = vcmask 982016
    %v1164 = vsel %vm1162, %v99, 0
    %vm1166 = vcmask 1043456
    %v1168 = vsel %vm1166, %v986, 0
    %v1171 = vsel %vm1166, %v987, 0
    %1173 = vmatprep.subr.bf16.mxu0 %v813
    %1174 = vmatpush1.bf16.msra.mxu0 %v812
    %1175 = vmatprep.subr.bf16.mxu0 %v815
    %1176 = vmatpush1.bf16.msra.mxu0 %v814
    %1177 = vmatprep.subr.bf16.mxu0 %v817
    %1178 = vmatpush1.bf16.msra.mxu0 %v816
    %1179 = vmatprep.subr.bf16.mxu0 %v819
    %1180 = vmatpush1.bf16.msra.mxu0 %v818
    %1181 = vmatprep.subr.bf16.mxu0 %v821
    %1182 = vmatpush1.bf16.msra.mxu0 %v820
    %1183 = vmatprep.subr.bf16.mxu0 %v823
    %1184 = vmatpush1.bf16.msra.mxu0 %v822
    %1185 = vmatprep.subr.bf16.mxu0 %v825
    %1186 = vmatpush1.bf16.msra.mxu0 %v824
    %1187 = vmatprep.subr.bf16.mxu0 %v827
    %1188 = vmatpush1.bf16.msra.mxu0 %v826
    %1189 = vmatprep.subr.bf16.mxu0 %v829
    %1190 = vmatpush1.bf16.msra.mxu0 %v828
    %1191 = vmatprep.subr.bf16.mxu0 %v831
    %1192 = vmatpush1.bf16.msra.mxu0 %v830
    %1193 = vmatprep.subr.bf16.mxu0 %v833
    %1194 = vmatpush1.bf16.msra.mxu0 %v832
    %1195 = vmatprep.subr.bf16.mxu0 %v835
    %1196 = vmatpush1.bf16.msra.mxu0 %v834
    %1197 = vmatprep.subr.bf16.mxu0 %v837
    %1198 = vmatpush1.bf16.msra.mxu0 %v836
    %1199 = vmatprep.subr.bf16.mxu0 %v839
    %1200 = vmatpush1.bf16.msra.mxu0 %v838
    %1201 = vmatprep.subr.bf16.mxu0 %v841
    %1202 = vmatpush1.bf16.msra.mxu0 %v840
    %1203 = vmatprep.subr.bf16.mxu0 %v843
    %1204 = vmatpush1.bf16.msra.mxu0 %v842
    %1205 = vmatprep.mubr.bf16.mxu0 %v90
    %1206 = vmatmul.mubr.bf16.gmra.mrb[0].mxu0 %v89
    %v1207 = vpop.f32.mrb[0].mxu0
    %v1208 = vadd.f32 %v280, %v1207
    %v1209 = vpop.f32.mrb[0].mxu0
    %v1210 = vadd.f32 %v284, %v1209
    %v1211 = vpop.f32.mrb[0].mxu0
    %v1212 = vpop.f32.mrb[0].mxu0
    %1213 = vdwg.mxu0
    %1214 = vmatprep.subr.bf16.mxu0 %v845
    %1215 = vmatpush1.bf16.msra.mxu0 %v844
    %1216 = vmatprep.subr.bf16.mxu0 %v847
    %1217 = vmatpush1.bf16.msra.mxu0 %v846
    %1218 = vmatprep.subr.bf16.mxu0 %v849
    %1219 = vmatpush1.bf16.msra.mxu0 %v848
    %1220 = vmatprep.subr.bf16.mxu0 %v851
    %1221 = vmatpush1.bf16.msra.mxu0 %v850
    %1222 = vmatprep.subr.bf16.mxu0 %v853
    %1223 = vmatpush1.bf16.msra.mxu0 %v852
    %1224 = vmatprep.subr.bf16.mxu0 %v855
    %1225 = vmatpush1.bf16.msra.mxu0 %v854
    %1226 = vmatprep.subr.bf16.mxu0 %v857
    %1227 = vmatpush1.bf16.msra.mxu0 %v856
    %1228 = vmatprep.subr.bf16.mxu0 %v859
    %1229 = vmatpush1.bf16.msra.mxu0 %v858
    %1230 = vmatprep.subr.bf16.mxu0 %v861
    %1231 = vmatpush1.bf16.msra.mxu0 %v860
    %1232 = vmatprep.subr.bf16.mxu0 %v863
    %1233 = vmatpush1.bf16.msra.mxu0 %v862
    %1234 = vmatprep.subr.bf16.mxu0 %v865
    %1235 = vmatpush1.bf16.msra.mxu0 %v864
    %1236 = vmatprep.subr.bf16.mxu0 %v867
    %1237 = vmatpush1.bf16.msra.mxu0 %v866
    %1238 = vmatprep.subr.bf16.mxu0 %v869
    %1239 = vmatpush1.bf16.msra.mxu0 %v868
    %1240 = vmatprep.subr.bf16.mxu0 %v871
    %1241 = vmatpush1.bf16.msra.mxu0 %v870
    %1242 = vmatprep.subr.bf16.mxu0 %v873
    %1243 = vmatpush1.bf16.msra.mxu0 %v872
    %1244 = vmatprep.subr.bf16.mxu0 %v875
    %1245 = vmatpush1.bf16.msra.mxu0 %v874
    %1246 = vmatprep.mubr.bf16.mxu0 %v92
    %1247 = vmatmul.mubr.bf16.gmra.mrb[0].mxu0 %v91
    %v1248 = vpop.f32.mrb[0].mxu0
    %v1249 = vadd.f32 %v1208, %v1248
    %v1250 = vpop.f32.mrb[0].mxu0
    %v1251 = vadd.f32 %v1210, %v1250
    %v1252 = vpop.f32.mrb[0].mxu0
    %v1253 = vpop.f32.mrb[0].mxu0
    %1254 = vdwg.mxu0
    %1255 = vmatprep.subr.bf16.mxu0 %v877
    %1256 = vmatpush1.bf16.msra.mxu0 %v876
    %1257 = vmatprep.subr.bf16.mxu0 %v879
    %1258 = vmatpush1.bf16.msra.mxu0 %v878
    %1259 = vmatprep.subr.bf16.mxu0 %v881
    %1260 = vmatpush1.bf16.msra.mxu0 %v880
    %1261 = vmatprep.subr.bf16.mxu0 %v883
    %1262 = vmatpush1.bf16.msra.mxu0 %v882
    %1263 = vmatprep.subr.bf16.mxu0 %v885
    %1264 = vmatpush1.bf16.msra.mxu0 %v884
    %1265 = vmatprep.subr.bf16.mxu0 %v887
    %1266 = vmatpush1.bf16.msra.mxu0 %v886
    %1267 = vmatprep.subr.bf16.mxu0 %v889
    %1268 = vmatpush1.bf16.msra.mxu0 %v888
    %1269 = vmatprep.subr.bf16.mxu0 %v891
    %1270 = vmatpush1.bf16.msra.mxu0 %v890
    %1271 = vmatprep.subr.bf16.mxu0 %v893
    %1272 = vmatpush1.bf16.msra.mxu0 %v892
    %1273 = vmatprep.subr.bf16.mxu0 %v895
    %1274 = vmatpush1.bf16.msra.mxu0 %v894
    %1275 = vmatprep.subr.bf16.mxu0 %v897
    %1276 = vmatpush1.bf16.msra.mxu0 %v896
    %1277 = vmatprep.subr.bf16.mxu0 %v899
    %1278 = vmatpush1.bf16.msra.mxu0 %v898
    %1279 = vmatprep.subr.bf16.mxu0 %v901
    %1280 = vmatpush1.bf16.msra.mxu0 %v900
    %1281 = vmatprep.subr.bf16.mxu0 %v903
    %1282 = vmatpush1.bf16.msra.mxu0 %v902
    %1283 = vmatprep.subr.bf16.mxu0 %v905
    %1284 = vmatpush1.bf16.msra.mxu0 %v904
    %1285 = vmatprep.subr.bf16.mxu0 %v907
    %1286 = vmatpush1.bf16.msra.mxu0 %v906
    %1287 = vmatprep.mubr.bf16.mxu0 %v94
    %1288 = vmatmul.mubr.bf16.gmra.mrb[0].mxu0 %v93
    %v1289 = vpop.f32.mrb[0].mxu0
    %v1290 = vadd.f32 %v1249, %v1289
    %v1291 = vpop.f32.mrb[0].mxu0
    %v1292 = vadd.f32 %v1251, %v1291
    %v1293 = vpop.f32.mrb[0].mxu0
    %v1294 = vpop.f32.mrb[0].mxu0
    %1295 = vdwg.mxu0
    %1296 = vmatprep.subr.bf16.mxu0 %v909
    %1297 = vmatpush1.bf16.msra.mxu0 %v908
    %1298 = vmatprep.subr.bf16.mxu0 %v911
    %1299 = vmatpush1.bf16.msra.mxu0 %v910
    %1300 = vmatprep.subr.bf16.mxu0 %v913
    %1301 = vmatpush1.bf16.msra.mxu0 %v912
    %1302 = vmatprep.subr.bf16.mxu0 %v915
    %1303 = vmatpush1.bf16.msra.mxu0 %v914
    %1304 = vmatprep.subr.bf16.mxu0 %v917
    %1305 = vmatpush1.bf16.msra.mxu0 %v916
    %1306 = vmatprep.subr.bf16.mxu0 %v919
    %1307 = vmatpush1.bf16.msra.mxu0 %v918
    %1308 = vmatprep.subr.bf16.mxu0 %v921
    %1309 = vmatpush1.bf16.msra.mxu0 %v920
    %1310 = vmatprep.subr.bf16.mxu0 %v923
    %1311 = vmatpush1.bf16.msra.mxu0 %v922
    %1312 = vmatprep.subr.bf16.mxu0 %v925
    %1313 = vmatpush1.bf16.msra.mxu0 %v924
    %1314 = vmatprep.subr.bf16.mxu0 %v927
    %1315 = vmatpush1.bf16.msra.mxu0 %v926
    %1316 = vmatprep.subr.bf16.mxu0 %v929
    %1317 = vmatpush1.bf16.msra.mxu0 %v928
    %1318 = vmatprep.subr.bf16.mxu0 %v931
    %1319 = vmatpush1.bf16.msra.mxu0 %v930
    %1320 = vmatprep.subr.bf16.mxu0 %v933
    %1321 = vmatpush1.bf16.msra.mxu0 %v932
    %1322 = vmatprep.subr.bf16.mxu0 %v935
    %1323 = vmatpush1.bf16.msra.mxu0 %v934
    %1324 = vmatprep.subr.bf16.mxu0 %v937
    %1325 = vmatpush1.bf16.msra.mxu0 %v936
    %1326 = vmatprep.subr.bf16.mxu0 %v939
    %1327 = vmatpush1.bf16.msra.mxu0 %v938
    %1328 = vmatprep.mubr.bf16.mxu0 %v96
    %1329 = vmatmul.mubr.bf16.gmra.mrb[0].mxu0 %v95
    %v1330 = vpop.f32.mrb[0].mxu0
    %v1331 = vadd.f32 %v1290, %v1330
    %v1332 = vpop.f32.mrb[0].mxu0
    %v1333 = vadd.f32 %v1292, %v1332
    %v1334 = vpop.f32.mrb[0].mxu0
    %v1335 = vpop.f32.mrb[0].mxu0
    %1336 = vdwg.mxu0
    %1337 = vmatprep.subr.bf16.mxu0 %v941
    %1338 = vmatpush1.bf16.msra.mxu0 %v940
    %1339 = vmatprep.subr.bf16.mxu0 %v943
    %1340 = vmatpush1.bf16.msra.mxu0 %v942
    %1341 = vmatprep.subr.bf16.mxu0 %v945
    %1342 = vmatpush1.bf16.msra.mxu0 %v944
    %1343 = vmatprep.subr.bf16.mxu0 %v947
    %1344 = vmatpush1.bf16.msra.mxu0 %v946
    %1345 = vmatprep.subr.bf16.mxu0 %v949
    %1346 = vmatpush1.bf16.msra.mxu0 %v948
    %1347 = vmatprep.subr.bf16.mxu0 %v951
    %1348 = vmatpush1.bf16.msra.mxu0 %v950
    %1349 = vmatprep.subr.bf16.mxu0 %v953
    %1350 = vmatpush1.bf16.msra.mxu0 %v952
    %1351 = vmatprep.subr.bf16.mxu0 %v955
    %1352 = vmatpush1.bf16.msra.mxu0 %v954
    %1353 = vmatprep.subr.bf16.mxu0 %v957
    %1354 = vmatpush1.bf16.msra.mxu0 %v956
    %1355 = vmatprep.subr.bf16.mxu0 %v959
    %1356 = vmatpush1.bf16.msra.mxu0 %v958
    %1357 = vmatprep.subr.bf16.mxu0 %v961
    %1358 = vmatpush1.bf16.msra.mxu0 %v960
    %1359 = vmatprep.subr.bf16.mxu0 %v963
    %1360 = vmatpush1.bf16.msra.mxu0 %v962
    %1361 = vmatprep.subr.bf16.mxu0 %v965
    %1362 = vmatpush1.bf16.msra.mxu0 %v964
    %1363 = vmatprep.subr.bf16.mxu0 %v967
    %1364 = vmatpush1.bf16.msra.mxu0 %v966
    %1365 = vmatprep.subr.bf16.mxu0 %v969
    %1366 = vmatpush1.bf16.msra.mxu0 %v968
    %1367 = vmatprep.subr.bf16.mxu0 %v971
    %1368 = vmatpush1.bf16.msra.mxu0 %v970
    %1369 = vmatprep.mubr.bf16.mxu0 %v98
    %1370 = vmatmul.mubr.bf16.gmra.mrb[0].mxu0 %v97
    %v1371 = vpop.f32.mrb[0].mxu0
    %v1372 = vadd.f32 %v1331, %v1371
    %v1373 = vpop.f32.mrb[0].mxu0
    %v1374 = vadd.f32 %v1333, %v1373
    %v1375 = vpop.f32.mrb[0].mxu0
    %v1376 = vpop.f32.mrb[0].mxu0
    %1377 = vdwg.mxu0
    %1378 = vmatprep.subr.bf16.mxu0 %v973
    %1379 = vmatpush1.bf16.msra.mxu0 %v972
    %1380 = vmatprep.subr.bf16.mxu0 %v975
    %1381 = vmatpush1.bf16.msra.mxu0 %v974
    %1382 = vmatprep.subr.bf16.mxu0 %v977
    %1383 = vmatpush1.bf16.msra.mxu0 %v976
    %1384 = vmatprep.subr.bf16.mxu0 %v979
    %1385 = vmatpush1.bf16.msra.mxu0 %v978
    %1386 = vmatprep.subr.bf16.mxu0 %v981
    %1387 = vmatpush1.bf16.msra.mxu0 %v980
    %1388 = vmatprep.subr.bf16.mxu0 %v983
    %1389 = vmatpush1.bf16.msra.mxu0 %v982
    %1390 = vmatprep.subr.bf16.mxu0 %v985
    %1391 = vmatpush1.bf16.msra.mxu0 %v984
    %1392 = vmatprep.subr.bf16.mxu0 %v1171
    %1393 = vmatpush1.bf16.msra.mxu0 %v1168
    %1394 = vmatprep.subr.bf16.mxu0 0
    %1395 = vmatpush1.bf16.msra.mxu0 0
    %1396 = vmatprep.subr.bf16.mxu0 0
    %1397 = vmatpush1.bf16.msra.mxu0 0
    %1398 = vmatprep.subr.bf16.mxu0 0
    %1399 = vmatpush1.bf16.msra.mxu0 0
    %1400 = vmatprep.subr.bf16.mxu0 0
    %1401 = vmatpush1.bf16.msra.mxu0 0
    %1402 = vmatprep.subr.bf16.mxu0 0
    %1403 = vmatpush1.bf16.msra.mxu0 0
    %1404 = vmatprep.subr.bf16.mxu0 0
    %1405 = vmatpush1.bf16.msra.mxu0 0
    %1406 = vmatprep.subr.bf16.mxu0 0
    %1407 = vmatpush1.bf16.msra.mxu0 0
    %1408 = vmatprep.subr.bf16.mxu0 0
    %1409 = vmatpush1.bf16.msra.mxu0 0
    %1410 = vmatprep.mubr.bf16.mxu0 0
    %1411 = vmatmul.mubr.bf16.gmra.mrb[0].mxu0 %v1164
    %v1412 = vpop.f32.mrb[0].mxu0
    %v1413 = vadd.f32 %v1372, %v1412
    %v1414 = vpop.f32.mrb[0].mxu0
    %v1415 = vadd.f32 %v1374, %v1414
    %v1416 = vpop.f32.mrb[0].mxu0
    %v1417 = vpop.f32.mrb[0].mxu0
    %1418 = vdwg.mxu0
    %vm1419 = vcmp.gt.f32.partialorder %v1413, 0.0
    %vm1420 = vcmp.gt.f32.partialorder %v1415, 0.0
    %v1421 = vmul.f32 %v1413, 1.442695
    %v1422 = vpow.pop %v1421
    %v1423 = vmul.f32 %v1415, 1.442695
    %v1424 = vpow.pop %v1423
    %v1425 = vsub.f32 %v1422, 1.0
    %v1426 = vsub.f32 %v1424, 1.0
    %v1427 = vmul.f32 %v1425, 1.6732632
    %v1428 = vmul.f32 %v1426, 1.6732632
    %v1429 = vsel %vm1419, %v1413, %v1427
    %v1430 = vsel %vm1420, %v1415, %v1428
    %v1431 = vmul.f32 %v1429, 1.050701
    %v1432 = vmul.f32 %v1430, 1.050701
    %v1433 = vlaneseq
    %v1434 = vand.u32 %v1433, 127
    %vm1435 = vcmp.lt.s32.totalorder %v1434, 16
    %v1436 = vsel %vm1435, %v1431, -inf
    %vm1437 = vcmask 1041408
    %v1438 = vsel %vm1437, %v1436, -inf
    %1439 = vmax.xlane.f32.xlu0 %v1438
    %v1440 = vpop.xlane.xlu0 %1439
    %v1441 = vsub.f32 %v1436, %v1440
    %v1442 = vmul.f32 %v1441, 1.442695
    %v1443 = vpow.pop %v1442
    %v1444 = vsel %vm1437, %v1443, 0.0
    %1445 = vadd.xlane.f32.xlu0 %v1444
    %v1446 = vpop.xlane.xlu0 %1445
    %v1447 = vrcp.pop %v1446
    %v1448 = vmul.f32 %v1443, %v1447
    %v1449 = vsel %vm1435, %v1448, %v1431
    %v1450 = vpack.c.bf16 %v1449, %v1449
    %v1451 = vpack.c.bf16 %v1432, %v1432
    %v1452 = vld [vmem:[%s3] sm:$0xff]
    %v1453 = vld [vmem:[%s3 + $0x8] sm:$0xff]
    %v1454 = vld [vmem:[%s3 + $0x10] sm:$0xff]
    %v1455 = vld [vmem:[%s3 + $0x18] sm:$0xff]
    %v1456 = vld [vmem:[%s3 + $0x20] sm:$0xff]
    %v1457 = vld [vmem:[%s3 + $0x28] sm:$0xff]
    %v1458 = vld [vmem:[%s3 + $0x30] sm:$0xff]
    %v1459 = vld [vmem:[%s3 + $0x38] sm:$0xff]
    %v1460 = vld [vmem:[%s3 + $0x40] sm:$0xff]
    %v1461 = vld [vmem:[%s3 + $0x48] sm:$0xff]
    %v1462 = vld [vmem:[%s3 + $0x50] sm:$0xff]
    %v1463 = vld [vmem:[%s3 + $0x58] sm:$0xff]
    %v1464 = vld [vmem:[%s3 + $0x60] sm:$0xff]
    %v1465 = vld [vmem:[%s3 + $0x68] sm:$0xff]
    %v1466 = vld [vmem:[%s3 + $0x70] sm:$0xff]
    %v1467 = vld [vmem:[%s3 + $0x78] sm:$0xff]
    %v1468 = vld [vmem:[%s3 + $0x80] sm:$0xff]
    %v1469 = vld [vmem:[%s3 + $0x88] sm:$0xff]
    %v1488 = vunpack.c.l.b16 %v1452
    %v1489 = vunpack.c.h.b16 %v1452
    %v1490 = vunpack.c.l.b16 %v1453
    %v1491 = vunpack.c.h.b16 %v1453
    %v1492 = vunpack.c.l.b16 %v1454
    %v1493 = vunpack.c.h.b16 %v1454
    %v1494 = vunpack.c.l.b16 %v1455
    %v1495 = vunpack.c.h.b16 %v1455
    %v1496 = vunpack.c.l.b16 %v1456
    %v1497 = vunpack.c.h.b16 %v1456
    %v1498 = vunpack.c.l.b16 %v1457
    %v1499 = vunpack.c.h.b16 %v1457
    %v1500 = vunpack.c.l.b16 %v1458
    %v1501 = vunpack.c.h.b16 %v1458
    %v1502 = vunpack.c.l.b16 %v1459
    %v1503 = vunpack.c.h.b16 %v1459
    %v1504 = vunpack.c.l.b16 %v1460
    %v1505 = vunpack.c.h.b16 %v1460
    %v1506 = vunpack.c.l.b16 %v1461
    %v1507 = vunpack.c.h.b16 %v1461
    %v1508 = vunpack.c.l.b16 %v1462
    %v1509 = vunpack.c.h.b16 %v1462
    %v1510 = vunpack.c.l.b16 %v1463
    %v1511 = vunpack.c.h.b16 %v1463
    %v1512 = vunpack.c.l.b16 %v1464
    %v1513 = vunpack.c.h.b16 %v1464
    %v1514 = vunpack.c.l.b16 %v1465
    %v1515 = vunpack.c.h.b16 %v1465
    %v1516 = vunpack.c.l.b16 %v1466
    %v1517 = vunpack.c.h.b16 %v1466
    %v1518 = vunpack.c.l.b16 %v1467
    %v1519 = vunpack.c.h.b16 %v1467
    %v1520 = vunpack.c.l.b16 %v1468
    %v1521 = vunpack.c.h.b16 %v1468
    %v1522 = vunpack.c.l.b16 %v1469
    %v1523 = vunpack.c.h.b16 %v1469
    %v1524 = vpack.c.b16 %v1490, %v1488
    %v1525 = vpack.c.b16 %v1491, %v1489
    %v1526 = vpack.c.b16 %v1494, %v1492
    %v1527 = vpack.c.b16 %v1495, %v1493
    %v1528 = vpack.c.b16 %v1498, %v1496
    %v1529 = vpack.c.b16 %v1499, %v1497
    %v1530 = vpack.c.b16 %v1502, %v1500
    %v1531 = vpack.c.b16 %v1503, %v1501
    %v1532 = vpack.c.b16 %v1506, %v1504
    %v1533 = vpack.c.b16 %v1507, %v1505
    %v1534 = vpack.c.b16 %v1510, %v1508
    %v1535 = vpack.c.b16 %v1511, %v1509
    %v1536 = vpack.c.b16 %v1514, %v1512
    %v1537 = vpack.c.b16 %v1515, %v1513
    %v1538 = vpack.c.b16 %v1518, %v1516
    %v1539 = vpack.c.b16 %v1519, %v1517
    %v1540 = vpack.c.b16 %v1522, %v1520
    %v1541 = vpack.c.b16 %v1523, %v1521
    %vm1560 = vcmask 130048
    %v1562 = vsel %vm1560, %v1451, 0
    %1564 = vmatprep.subr.bf16.mxu0 %v1525
    %1565 = vmatpush1.bf16.msra.mxu0 %v1524
    %1566 = vmatprep.subr.bf16.mxu0 %v1527
    %1567 = vmatpush1.bf16.msra.mxu0 %v1526
    %1568 = vmatprep.subr.bf16.mxu0 %v1529
    %1569 = vmatpush1.bf16.msra.mxu0 %v1528
    %1570 = vmatprep.subr.bf16.mxu0 %v1531
    %1571 = vmatpush1.bf16.msra.mxu0 %v1530
    %1572 = vmatprep.subr.bf16.mxu0 %v1533
    %1573 = vmatpush1.bf16.msra.mxu0 %v1532
    %1574 = vmatprep.subr.bf16.mxu0 %v1535
    %1575 = vmatpush1.bf16.msra.mxu0 %v1534
    %1576 = vmatprep.subr.bf16.mxu0 %v1537
    %1577 = vmatpush1.bf16.msra.mxu0 %v1536
    %1578 = vmatprep.subr.bf16.mxu0 %v1539
    %1579 = vmatpush1.bf16.msra.mxu0 %v1538
    %1580 = vmatprep.subr.bf16.mxu0 %v1541
    %1581 = vmatpush1.bf16.msra.mxu0 %v1540
    %1582 = vmatprep.subr.bf16.mxu0 0
    %1583 = vmatpush1.bf16.msra.mxu0 0
    %1584 = vmatprep.subr.bf16.mxu0 0
    %1585 = vmatpush1.bf16.msra.mxu0 0
    %1586 = vmatprep.subr.bf16.mxu0 0
    %1587 = vmatpush1.bf16.msra.mxu0 0
    %1588 = vmatprep.subr.bf16.mxu0 0
    %1589 = vmatpush1.bf16.msra.mxu0 0
    %1590 = vmatprep.subr.bf16.mxu0 0
    %1591 = vmatpush1.bf16.msra.mxu0 0
    %1592 = vmatprep.subr.bf16.mxu0 0
    %1593 = vmatpush1.bf16.msra.mxu0 0
    %1594 = vmatprep.subr.bf16.mxu0 0
    %1595 = vmatpush1.bf16.msra.mxu0 0
    %1596 = vmatprep.mubr.bf16.mxu0 %v1562
    %1597 = vmatmul.mubr.bf16.gmra.mrb[0].mxu0 %v1450
    %v1598 = vpop.f32.mrb[0].mxu0
    %v1599 = vadd.f32 0.0, %v1598
    %v1600 = vpop.f32.mrb[0].mxu0
    %v1601 = vadd.f32 0.0, %v1600
    %v1602 = vpop.f32.mrb[0].mxu0
    %v1603 = vpop.f32.mrb[0].mxu0
    %1604 = vdwg.mxu0
    %vm1605 = vcmp.gt.f32.partialorder %v1599, 0.0
    %vm1606 = vcmp.gt.f32.partialorder %v1601, 0.0
    %v1607 = vmul.f32 %v1599, 1.442695
    %v1608 = vpow.pop %v1607
    %v1609 = vmul.f32 %v1601, 1.442695
    %v1610 = vpow.pop %v1609
    %v1611 = vsub.f32 %v1608, 1.0
    %v1612 = vsub.f32 %v1610, 1.0
    %v1613 = vmul.f32 %v1611, 1.6732632
    %v1614 = vmul.f32 %v1612, 1.6732632
    %v1615 = vsel %vm1605, %v1599, %v1613
    %v1616 = vsel %vm1606, %v1601, %v1614
    %v1617 = vmul.f32 %v1615, 1.050701
    %v1618 = vmul.f32 %v1616, 1.050701
    %v1619 = vpack.c.bf16 %v1617, %v1617
    %v1620 = vpack.c.bf16 %v1618, %v1618
    %s1621 = scalar_lea.vmem %s3, 144
    %v1622 = vld [vmem:[%s1621] sm:$0xff]
    %v1623 = vld [vmem:[%s1621 + $0x8] sm:$0xff]
    %v1624 = vld [vmem:[%s1621 + $0x10] sm:$0xff]
    %v1625 = vld [vmem:[%s1621 + $0x18] sm:$0xff]
    %v1626 = vld [vmem:[%s1621 + $0x20] sm:$0xff]
    %v1627 = vld [vmem:[%s1621 + $0x28] sm:$0xff]
    %v1628 = vld [vmem:[%s1621 + $0x30] sm:$0xff]
    %v1629 = vld [vmem:[%s1621 + $0x38] sm:$0xff]
    %v1630 = vld [vmem:[%s1621 + $0x40] sm:$0xff]
    %v1631 = vld [vmem:[%s1621 + $0x48] sm:$0xff]
    %v1632 = vld [vmem:[%s1621 + $0x50] sm:$0xff]
    %v1633 = vld [vmem:[%s1621 + $0x58] sm:$0xff]
    %v1634 = vld [vmem:[%s1621 + $0x60] sm:$0xff]
    %v1635 = vld [vmem:[%s1621 + $0x68] sm:$0xff]
    %v1636 = vld [vmem:[%s1621 + $0x70] sm:$0xff]
    %v1637 = vld [vmem:[%s1621 + $0x78] sm:$0xff]
    %v1638 = vld [vmem:[%s1621 + $0x80] sm:$0xff]
    %v1639 = vld [vmem:[%s1621 + $0x88] sm:$0xff]
    %v1658 = vunpack.c.l.b16 %v1622
    %v1659 = vunpack.c.h.b16 %v1622
    %v1660 = vunpack.c.l.b16 %v1623
    %v1661 = vunpack.c.h.b16 %v1623
    %v1662 = vunpack.c.l.b16 %v1624
    %v1663 = vunpack.c.h.b16 %v1624
    %v1664 = vunpack.c.l.b16 %v1625
    %v1665 = vunpack.c.h.b16 %v1625
    %v1666 = vunpack.c.l.b16 %v1626
    %v1667 = vunpack.c.h.b16 %v1626
    %v1668 = vunpack.c.l.b16 %v1627
    %v1669 = vunpack.c.h.b16 %v1627
    %v1670 = vunpack.c.l.b16 %v1628
    %v1671 = vunpack.c.h.b16 %v1628
    %v1672 = vunpack.c.l.b16 %v1629
    %v1673 = vunpack.c.h.b16 %v1629
    %v1674 = vunpack.c.l.b16 %v1630
    %v1675 = vunpack.c.h.b16 %v1630
    %v1676 = vunpack.c.l.b16 %v1631
    %v1677 = vunpack.c.h.b16 %v1631
    %v1678 = vunpack.c.l.b16 %v1632
    %v1679 = vunpack.c.h.b16 %v1632
    %v1680 = vunpack.c.l.b16 %v1633
    %v1681 = vunpack.c.h.b16 %v1633
    %v1682 = vunpack.c.l.b16 %v1634
    %v1683 = vunpack.c.h.b16 %v1634
    %v1684 = vunpack.c.l.b16 %v1635
    %v1685 = vunpack.c.h.b16 %v1635
    %v1686 = vunpack.c.l.b16 %v1636
    %v1687 = vunpack.c.h.b16 %v1636
    %v1688 = vunpack.c.l.b16 %v1637
    %v1689 = vunpack.c.h.b16 %v1637
    %v1690 = vunpack.c.l.b16 %v1638
    %v1691 = vunpack.c.h.b16 %v1638
    %v1692 = vunpack.c.l.b16 %v1639
    %v1693 = vunpack.c.h.b16 %v1639
    %v1694 = vpack.c.b16 %v1660, %v1658
    %v1695 = vpack.c.b16 %v1661, %v1659
    %v1696 = vpack.c.b16 %v1664, %v1662
    %v1697 = vpack.c.b16 %v1665, %v1663
    %v1698 = vpack.c.b16 %v1668, %v1666
    %v1699 = vpack.c.b16 %v1669, %v1667
    %v1700 = vpack.c.b16 %v1672, %v1670
    %v1701 = vpack.c.b16 %v1673, %v1671
    %v1702 = vpack.c.b16 %v1676, %v1674
    %v1703 = vpack.c.b16 %v1677, %v1675
    %v1704 = vpack.c.b16 %v1680, %v1678
    %v1705 = vpack.c.b16 %v1681, %v1679
    %v1706 = vpack.c.b16 %v1684, %v1682
    %v1707 = vpack.c.b16 %v1685, %v1683
    %v1708 = vpack.c.b16 %v1688, %v1686
    %v1709 = vpack.c.b16 %v1689, %v1687
    %v1710 = vpack.c.b16 %v1692, %v1690
    %v1711 = vpack.c.b16 %v1693, %v1691
    %v1731 = vsel %vm1560, %v1620, 0
    %1733 = vmatprep.subr.bf16.mxu0 %v1695
    %1734 = vmatpush1.bf16.msra.mxu0 %v1694
    %1735 = vmatprep.subr.bf16.mxu0 %v1697
    %1736 = vmatpush1.bf16.msra.mxu0 %v1696
    %1737 = vmatprep.subr.bf16.mxu0 %v1699
    %1738 = vmatpush1.bf16.msra.mxu0 %v1698
    %1739 = vmatprep.subr.bf16.mxu0 %v1701
    %1740 = vmatpush1.bf16.msra.mxu0 %v1700
    %1741 = vmatprep.subr.bf16.mxu0 %v1703
    %1742 = vmatpush1.bf16.msra.mxu0 %v1702
    %1743 = vmatprep.subr.bf16.mxu0 %v1705
    %1744 = vmatpush1.bf16.msra.mxu0 %v1704
    %1745 = vmatprep.subr.bf16.mxu0 %v1707
    %1746 = vmatpush1.bf16.msra.mxu0 %v1706
    %1747 = vmatprep.subr.bf16.mxu0 %v1709
    %1748 = vmatpush1.bf16.msra.mxu0 %v1708
    %1749 = vmatprep.subr.bf16.mxu0 %v1711
    %1750 = vmatpush1.bf16.msra.mxu0 %v1710
    %1751 = vmatprep.subr.bf16.mxu0 0
    %1752 = vmatpush1.bf16.msra.mxu0 0
    %1753 = vmatprep.subr.bf16.mxu0 0
    %1754 = vmatpush1.bf16.msra.mxu0 0
    %1755 = vmatprep.subr.bf16.mxu0 0
    %1756 = vmatpush1.bf16.msra.mxu0 0
    %1757 = vmatprep.subr.bf16.mxu0 0
    %1758 = vmatpush1.bf16.msra.mxu0 0
    %1759 = vmatprep.subr.bf16.mxu0 0
    %1760 = vmatpush1.bf16.msra.mxu0 0
    %1761 = vmatprep.subr.bf16.mxu0 0
    %1762 = vmatpush1.bf16.msra.mxu0 0
    %1763 = vmatprep.subr.bf16.mxu0 0
    %1764 = vmatpush1.bf16.msra.mxu0 0
    %1765 = vmatprep.mubr.bf16.mxu0 %v1731
    %1766 = vmatmul.mubr.bf16.gmra.mrb[0].mxu0 %v1619
    %v1767 = vpop.f32.mrb[0].mxu0
    %v1768 = vadd.f32 0.0, %v1767
    %v1769 = vpop.f32.mrb[0].mxu0
    %v1770 = vadd.f32 0.0, %v1769
    %v1771 = vpop.f32.mrb[0].mxu0
    %v1772 = vpop.f32.mrb[0].mxu0
    %1773 = vdwg.mxu0
    %vm1774 = vcmp.gt.f32.partialorder %v1768, 0.0
    %vm1775 = vcmp.gt.f32.partialorder %v1770, 0.0
    %v1776 = vmul.f32 %v1768, 1.442695
    %v1777 = vpow.pop %v1776
    %v1778 = vmul.f32 %v1770, 1.442695
    %v1779 = vpow.pop %v1778
    %v1780 = vsub.f32 %v1777, 1.0
    %v1781 = vsub.f32 %v1779, 1.0
    %v1782 = vmul.f32 %v1780, 1.6732632
    %v1783 = vmul.f32 %v1781, 1.6732632
    %v1784 = vsel %vm1774, %v1768, %v1782
    %v1785 = vsel %vm1775, %v1770, %v1783
    %v1786 = vmul.f32 %v1784, 1.050701
    %v1787 = vmul.f32 %v1785, 1.050701
    %v1788 = vpack.c.bf16 %v1786, %v1786
    %v1789 = vpack.c.bf16 %v1787, %v1787
    %s1790 = scalar_lea.vmem %s3, 288
    %v1791 = vld [vmem:[%s1790] sm:$0xff]
    %v1792 = vld [vmem:[%s1790 + $0x8] sm:$0xff]
    %v1793 = vld [vmem:[%s1790 + $0x10] sm:$0xff]
    %v1794 = vld [vmem:[%s1790 + $0x18] sm:$0xff]
    %v1795 = vld [vmem:[%s1790 + $0x20] sm:$0xff]
    %v1796 = vld [vmem:[%s1790 + $0x28] sm:$0xff]
    %v1797 = vld [vmem:[%s1790 + $0x30] sm:$0xff]
    %v1798 = vld [vmem:[%s1790 + $0x38] sm:$0xff]
    %v1799 = vld [vmem:[%s1790 + $0x40] sm:$0xff]
    %v1800 = vld [vmem:[%s1790 + $0x48] sm:$0xff]
    %v1801 = vld [vmem:[%s1790 + $0x50] sm:$0xff]
    %v1802 = vld [vmem:[%s1790 + $0x58] sm:$0xff]
    %v1803 = vld [vmem:[%s1790 + $0x60] sm:$0xff]
    %v1804 = vld [vmem:[%s1790 + $0x68] sm:$0xff]
    %v1805 = vld [vmem:[%s1790 + $0x70] sm:$0xff]
    %v1806 = vld [vmem:[%s1790 + $0x78] sm:$0xff]
    %v1807 = vld [vmem:[%s1790 + $0x80] sm:$0xff]
    %v1808 = vld [vmem:[%s1790 + $0x88] sm:$0xff]
    %v1827 = vunpack.c.l.b16 %v1791
    %v1828 = vunpack.c.h.b16 %v1791
    %v1829 = vunpack.c.l.b16 %v1792
    %v1830 = vunpack.c.h.b16 %v1792
    %v1831 = vunpack.c.l.b16 %v1793
    %v1832 = vunpack.c.h.b16 %v1793
    %v1833 = vunpack.c.l.b16 %v1794
    %v1834 = vunpack.c.h.b16 %v1794
    %v1835 = vunpack.c.l.b16 %v1795
    %v1836 = vunpack.c.h.b16 %v1795
    %v1837 = vunpack.c.l.b16 %v1796
    %v1838 = vunpack.c.h.b16 %v1796
    %v1839 = vunpack.c.l.b16 %v1797
    %v1840 = vunpack.c.h.b16 %v1797
    %v1841 = vunpack.c.l.b16 %v1798
    %v1842 = vunpack.c.h.b16 %v1798
    %v1843 = vunpack.c.l.b16 %v1799
    %v1844 = vunpack.c.h.b16 %v1799
    %v1845 = vunpack.c.l.b16 %v1800
    %v1846 = vunpack.c.h.b16 %v1800
    %v1847 = vunpack.c.l.b16 %v1801
    %v1848 = vunpack.c.h.b16 %v1801
    %v1849 = vunpack.c.l.b16 %v1802
    %v1850 = vunpack.c.h.b16 %v1802
    %v1851 = vunpack.c.l.b16 %v1803
    %v1852 = vunpack.c.h.b16 %v1803
    %v1853 = vunpack.c.l.b16 %v1804
    %v1854 = vunpack.c.h.b16 %v1804
    %v1855 = vunpack.c.l.b16 %v1805
    %v1856 = vunpack.c.h.b16 %v1805
    %v1857 = vunpack.c.l.b16 %v1806
    %v1858 = vunpack.c.h.b16 %v1806
    %v1859 = vunpack.c.l.b16 %v1807
    %v1860 = vunpack.c.h.b16 %v1807
    %v1861 = vunpack.c.l.b16 %v1808
    %v1862 = vunpack.c.h.b16 %v1808
    %v1863 = vpack.c.b16 %v1829, %v1827
    %v1864 = vpack.c.b16 %v1830, %v1828
    %v1865 = vpack.c.b16 %v1833, %v1831
    %v1866 = vpack.c.b16 %v1834, %v1832
    %v1867 = vpack.c.b16 %v1837, %v1835
    %v1868 = vpack.c.b16 %v1838, %v1836
    %v1869 = vpack.c.b16 %v1841, %v1839
    %v1870 = vpack.c.b16 %v1842, %v1840
    %v1871 = vpack.c.b16 %v1845, %v1843
    %v1872 = vpack.c.b16 %v1846, %v1844
    %v1873 = vpack.c.b16 %v1849, %v1847
    %v1874 = vpack.c.b16 %v1850, %v1848
    %v1875 = vpack.c.b16 %v1853, %v1851
    %v1876 = vpack.c.b16 %v1854, %v1852
    %v1877 = vpack.c.b16 %v1857, %v1855
    %v1878 = vpack.c.b16 %v1858, %v1856
    %v1879 = vpack.c.b16 %v1861, %v1859
    %v1880 = vpack.c.b16 %v1862, %v1860
    %v1900 = vsel %vm1560, %v1789, 0
    %1902 = vmatprep.subr.bf16.mxu0 %v1864
    %1903 = vmatpush1.bf16.msra.mxu0 %v1863
    %1904 = vmatprep.subr.bf16.mxu0 %v1866
    %1905 = vmatpush1.bf16.msra.mxu0 %v1865
    %1906 = vmatprep.subr.bf16.mxu0 %v1868
    %1907 = vmatpush1.bf16.msra.mxu0 %v1867
    %1908 = vmatprep.subr.bf16.mxu0 %v1870
    %1909 = vmatpush1.bf16.msra.mxu0 %v1869
    %1910 = vmatprep.subr.bf16.mxu0 %v1872
    %1911 = vmatpush1.bf16.msra.mxu0 %v1871
    %1912 = vmatprep.subr.bf16.mxu0 %v1874
    %1913 = vmatpush1.bf16.msra.mxu0 %v1873
    %1914 = vmatprep.subr.bf16.mxu0 %v1876
    %1915 = vmatpush1.bf16.msra.mxu0 %v1875
    %1916 = vmatprep.subr.bf16.mxu0 %v1878
    %1917 = vmatpush1.bf16.msra.mxu0 %v1877
    %1918 = vmatprep.subr.bf16.mxu0 %v1880
    %1919 = vmatpush1.bf16.msra.mxu0 %v1879
    %1920 = vmatprep.subr.bf16.mxu0 0
    %1921 = vmatpush1.bf16.msra.mxu0 0
    %1922 = vmatprep.subr.bf16.mxu0 0
    %1923 = vmatpush1.bf16.msra.mxu0 0
    %1924 = vmatprep.subr.bf16.mxu0 0
    %1925 = vmatpush1.bf16.msra.mxu0 0
    %1926 = vmatprep.subr.bf16.mxu0 0
    %1927 = vmatpush1.bf16.msra.mxu0 0
    %1928 = vmatprep.subr.bf16.mxu0 0
    %1929 = vmatpush1.bf16.msra.mxu0 0
    %1930 = vmatprep.subr.bf16.mxu0 0
    %1931 = vmatpush1.bf16.msra.mxu0 0
    %1932 = vmatprep.subr.bf16.mxu0 0
    %1933 = vmatpush1.bf16.msra.mxu0 0
    %1934 = vmatprep.mubr.bf16.mxu0 %v1900
    %1935 = vmatmul.mubr.bf16.gmra.mrb[0].mxu0 %v1788
    %v1936 = vpop.f32.mrb[0].mxu0
    %v1937 = vadd.f32 0.0, %v1936
    %v1938 = vpop.f32.mrb[0].mxu0
    %v1939 = vadd.f32 0.0, %v1938
    %v1940 = vpop.f32.mrb[0].mxu0
    %v1941 = vpop.f32.mrb[0].mxu0
    %1942 = vdwg.mxu0
    %vm1943 = vcmp.gt.f32.partialorder %v1937, 0.0
    %vm1944 = vcmp.gt.f32.partialorder %v1939, 0.0
    %v1945 = vmul.f32 %v1937, 1.442695
    %v1946 = vpow.pop %v1945
    %v1947 = vmul.f32 %v1939, 1.442695
    %v1948 = vpow.pop %v1947
    %v1949 = vsub.f32 %v1946, 1.0
    %v1950 = vsub.f32 %v1948, 1.0
    %v1951 = vmul.f32 %v1949, 1.6732632
    %v1952 = vmul.f32 %v1950, 1.6732632
    %v1953 = vsel %vm1943, %v1937, %v1951
    %v1954 = vsel %vm1944, %v1939, %v1952
    %v1955 = vmul.f32 %v1953, 1.050701
    %v1956 = vmul.f32 %v1954, 1.050701
    %v1957 = vpack.c.bf16 %v1955, %v1955
    %v1958 = vpack.c.bf16 %v1956, %v1956
    %s1959 = scalar_lea.vmem %s3, 432
    %v1960 = vld [vmem:[%s1959] sm:$0xff]
    %v1961 = vld [vmem:[%s1959 + $0x8] sm:$0xff]
    %v1962 = vld [vmem:[%s1959 + $0x10] sm:$0xff]
    %v1963 = vld [vmem:[%s1959 + $0x18] sm:$0xff]
    %v1964 = vld [vmem:[%s1959 + $0x20] sm:$0xff]
    %v1965 = vld [vmem:[%s1959 + $0x28] sm:$0xff]
    %v1966 = vld [vmem:[%s1959 + $0x30] sm:$0xff]
    %v1967 = vld [vmem:[%s1959 + $0x38] sm:$0xff]
    %v1968 = vld [vmem:[%s1959 + $0x40] sm:$0xff]
    %v1969 = vld [vmem:[%s1959 + $0x48] sm:$0xff]
    %v1970 = vld [vmem:[%s1959 + $0x50] sm:$0xff]
    %v1971 = vld [vmem:[%s1959 + $0x58] sm:$0xff]
    %v1972 = vld [vmem:[%s1959 + $0x60] sm:$0xff]
    %v1973 = vld [vmem:[%s1959 + $0x68] sm:$0xff]
    %v1974 = vld [vmem:[%s1959 + $0x70] sm:$0xff]
    %v1975 = vld [vmem:[%s1959 + $0x78] sm:$0xff]
    %v1976 = vld [vmem:[%s1959 + $0x80] sm:$0xff]
    %v1977 = vld [vmem:[%s1959 + $0x88] sm:$0xff]
    %v1996 = vunpack.c.l.b16 %v1960
    %v1997 = vunpack.c.h.b16 %v1960
    %v1998 = vunpack.c.l.b16 %v1961
    %v1999 = vunpack.c.h.b16 %v1961
    %v2000 = vunpack.c.l.b16 %v1962
    %v2001 = vunpack.c.h.b16 %v1962
    %v2002 = vunpack.c.l.b16 %v1963
    %v2003 = vunpack.c.h.b16 %v1963
    %v2004 = vunpack.c.l.b16 %v1964
    %v2005 = vunpack.c.h.b16 %v1964
    %v2006 = vunpack.c.l.b16 %v1965
    %v2007 = vunpack.c.h.b16 %v1965
    %v2008 = vunpack.c.l.b16 %v1966
    %v2009 = vunpack.c.h.b16 %v1966
    %v2010 = vunpack.c.l.b16 %v1967
    %v2011 = vunpack.c.h.b16 %v1967
    %v2012 = vunpack.c.l.b16 %v1968
    %v2013 = vunpack.c.h.b16 %v1968
    %v2014 = vunpack.c.l.b16 %v1969
    %v2015 = vunpack.c.h.b16 %v1969
    %v2016 = vunpack.c.l.b16 %v1970
    %v2017 = vunpack.c.h.b16 %v1970
    %v2018 = vunpack.c.l.b16 %v1971
    %v2019 = vunpack.c.h.b16 %v1971
    %v2020 = vunpack.c.l.b16 %v1972
    %v2021 = vunpack.c.h.b16 %v1972
    %v2022 = vunpack.c.l.b16 %v1973
    %v2023 = vunpack.c.h.b16 %v1973
    %v2024 = vunpack.c.l.b16 %v1974
    %v2025 = vunpack.c.h.b16 %v1974
    %v2026 = vunpack.c.l.b16 %v1975
    %v2027 = vunpack.c.h.b16 %v1975
    %v2028 = vunpack.c.l.b16 %v1976
    %v2029 = vunpack.c.h.b16 %v1976
    %v2030 = vunpack.c.l.b16 %v1977
    %v2031 = vunpack.c.h.b16 %v1977
    %v2032 = vpack.c.b16 %v1998, %v1996
    %v2033 = vpack.c.b16 %v1999, %v1997
    %v2034 = vpack.c.b16 %v2002, %v2000
    %v2035 = vpack.c.b16 %v2003, %v2001
    %v2036 = vpack.c.b16 %v2006, %v2004
    %v2037 = vpack.c.b16 %v2007, %v2005
    %v2038 = vpack.c.b16 %v2010, %v2008
    %v2039 = vpack.c.b16 %v2011, %v2009
    %v2040 = vpack.c.b16 %v2014, %v2012
    %v2041 = vpack.c.b16 %v2015, %v2013
    %v2042 = vpack.c.b16 %v2018, %v2016
    %v2043 = vpack.c.b16 %v2019, %v2017
    %v2044 = vpack.c.b16 %v2022, %v2020
    %v2045 = vpack.c.b16 %v2023, %v2021
    %v2046 = vpack.c.b16 %v2026, %v2024
    %v2047 = vpack.c.b16 %v2027, %v2025
    %v2048 = vpack.c.b16 %v2030, %v2028
    %v2049 = vpack.c.b16 %v2031, %v2029
    %v2069 = vsel %vm1560, %v1958, 0
    %2071 = vmatprep.subr.bf16.mxu0 %v2033
    %2072 = vmatpush1.bf16.msra.mxu0 %v2032
    %2073 = vmatprep.subr.bf16.mxu0 %v2035
    %2074 = vmatpush1.bf16.msra.mxu0 %v2034
    %2075 = vmatprep.subr.bf16.mxu0 %v2037
    %2076 = vmatpush1.bf16.msra.mxu0 %v2036
    %2077 = vmatprep.subr.bf16.mxu0 %v2039
    %2078 = vmatpush1.bf16.msra.mxu0 %v2038
    %2079 = vmatprep.subr.bf16.mxu0 %v2041
    %2080 = vmatpush1.bf16.msra.mxu0 %v2040
    %2081 = vmatprep.subr.bf16.mxu0 %v2043
    %2082 = vmatpush1.bf16.msra.mxu0 %v2042
    %2083 = vmatprep.subr.bf16.mxu0 %v2045
    %2084 = vmatpush1.bf16.msra.mxu0 %v2044
    %2085 = vmatprep.subr.bf16.mxu0 %v2047
    %2086 = vmatpush1.bf16.msra.mxu0 %v2046
    %2087 = vmatprep.subr.bf16.mxu0 %v2049
    %2088 = vmatpush1.bf16.msra.mxu0 %v2048
    %2089 = vmatprep.subr.bf16.mxu0 0
    %2090 = vmatpush1.bf16.msra.mxu0 0
    %2091 = vmatprep.subr.bf16.mxu0 0
    %2092 = vmatpush1.bf16.msra.mxu0 0
    %2093 = vmatprep.subr.bf16.mxu0 0
    %2094 = vmatpush1.bf16.msra.mxu0 0
    %2095 = vmatprep.subr.bf16.mxu0 0
    %2096 = vmatpush1.bf16.msra.mxu0 0
    %2097 = vmatprep.subr.bf16.mxu0 0
    %2098 = vmatpush1.bf16.msra.mxu0 0
    %2099 = vmatprep.subr.bf16.mxu0 0
    %2100 = vmatpush1.bf16.msra.mxu0 0
    %2101 = vmatprep.subr.bf16.mxu0 0
    %2102 = vmatpush1.bf16.msra.mxu0 0
    %2103 = vmatprep.mubr.bf16.mxu0 %v2069
    %2104 = vmatmul.mubr.bf16.gmra.mrb[0].mxu0 %v1957
    %v2105 = vpop.f32.mrb[0].mxu0
    %v2106 = vadd.f32 0.0, %v2105
    %v2107 = vpop.f32.mrb[0].mxu0
    %v2108 = vadd.f32 0.0, %v2107
    %v2109 = vpop.f32.mrb[0].mxu0
    %v2110 = vpop.f32.mrb[0].mxu0
    %2111 = vdwg.mxu0
    %vm2112 = vcmp.gt.f32.partialorder %v2106, 0.0
    %vm2113 = vcmp.gt.f32.partialorder %v2108, 0.0
    %v2114 = vmul.f32 %v2106, 1.442695
    %v2115 = vpow.pop %v2114
    %v2116 = vmul.f32 %v2108, 1.442695
    %v2117 = vpow.pop %v2116
    %v2118 = vsub.f32 %v2115, 1.0
    %v2119 = vsub.f32 %v2117, 1.0
    %v2120 = vmul.f32 %v2118, 1.6732632
    %v2121 = vmul.f32 %v2119, 1.6732632
    %v2122 = vsel %vm2112, %v2106, %v2120
    %v2123 = vsel %vm2113, %v2108, %v2121
    %v2124 = vmul.f32 %v2122, 1.050701
    %v2125 = vmul.f32 %v2123, 1.050701
    %v2126 = vpack.c.bf16 %v2124, %v2124
    %v2127 = vpack.c.bf16 %v2125, %v2125
    %s2128 = scalar_lea.vmem %s3, 576
    %v2129 = vld [vmem:[%s2128] sm:$0xff]
    %v2130 = vld [vmem:[%s2128 + $0x8] sm:$0xff]
    %v2131 = vld [vmem:[%s2128 + $0x10] sm:$0xff]
    %v2132 = vld [vmem:[%s2128 + $0x18] sm:$0xff]
    %v2133 = vld [vmem:[%s2128 + $0x20] sm:$0xff]
    %v2134 = vld [vmem:[%s2128 + $0x28] sm:$0xff]
    %v2135 = vld [vmem:[%s2128 + $0x30] sm:$0xff]
    %v2136 = vld [vmem:[%s2128 + $0x38] sm:$0xff]
    %v2137 = vld [vmem:[%s2128 + $0x40] sm:$0xff]
    %v2138 = vld [vmem:[%s2128 + $0x48] sm:$0xff]
    %v2139 = vld [vmem:[%s2128 + $0x50] sm:$0xff]
    %v2140 = vld [vmem:[%s2128 + $0x58] sm:$0xff]
    %v2141 = vld [vmem:[%s2128 + $0x60] sm:$0xff]
    %v2142 = vld [vmem:[%s2128 + $0x68] sm:$0xff]
    %v2143 = vld [vmem:[%s2128 + $0x70] sm:$0xff]
    %v2144 = vld [vmem:[%s2128 + $0x78] sm:$0xff]
    %v2145 = vld [vmem:[%s2128 + $0x80] sm:$0xff]
    %v2146 = vld [vmem:[%s2128 + $0x88] sm:$0xff]
    %v2165 = vunpack.c.l.b16 %v2129
    %v2166 = vunpack.c.h.b16 %v2129
    %v2167 = vunpack.c.l.b16 %v2130
    %v2168 = vunpack.c.h.b16 %v2130
    %v2169 = vunpack.c.l.b16 %v2131
    %v2170 = vunpack.c.h.b16 %v2131
    %v2171 = vunpack.c.l.b16 %v2132
    %v2172 = vunpack.c.h.b16 %v2132
    %v2173 = vunpack.c.l.b16 %v2133
    %v2174 = vunpack.c.h.b16 %v2133
    %v2175 = vunpack.c.l.b16 %v2134
    %v2176 = vunpack.c.h.b16 %v2134
    %v2177 = vunpack.c.l.b16 %v2135
    %v2178 = vunpack.c.h.b16 %v2135
    %v2179 = vunpack.c.l.b16 %v2136
    %v2180 = vunpack.c.h.b16 %v2136
    %v2181 = vunpack.c.l.b16 %v2137
    %v2182 = vunpack.c.h.b16 %v2137
    %v2183 = vunpack.c.l.b16 %v2138
    %v2184 = vunpack.c.h.b16 %v2138
    %v2185 = vunpack.c.l.b16 %v2139
    %v2186 = vunpack.c.h.b16 %v2139
    %v2187 = vunpack.c.l.b16 %v2140
    %v2188 = vunpack.c.h.b16 %v2140
    %v2189 = vunpack.c.l.b16 %v2141
    %v2190 = vunpack.c.h.b16 %v2141
    %v2191 = vunpack.c.l.b16 %v2142
    %v2192 = vunpack.c.h.b16 %v2142
    %v2193 = vunpack.c.l.b16 %v2143
    %v2194 = vunpack.c.h.b16 %v2143
    %v2195 = vunpack.c.l.b16 %v2144
    %v2196 = vunpack.c.h.b16 %v2144
    %v2197 = vunpack.c.l.b16 %v2145
    %v2198 = vunpack.c.h.b16 %v2145
    %v2199 = vunpack.c.l.b16 %v2146
    %v2200 = vunpack.c.h.b16 %v2146
    %v2201 = vpack.c.b16 %v2167, %v2165
    %v2202 = vpack.c.b16 %v2168, %v2166
    %v2203 = vpack.c.b16 %v2171, %v2169
    %v2204 = vpack.c.b16 %v2172, %v2170
    %v2205 = vpack.c.b16 %v2175, %v2173
    %v2206 = vpack.c.b16 %v2176, %v2174
    %v2207 = vpack.c.b16 %v2179, %v2177
    %v2208 = vpack.c.b16 %v2180, %v2178
    %v2209 = vpack.c.b16 %v2183, %v2181
    %v2210 = vpack.c.b16 %v2184, %v2182
    %v2211 = vpack.c.b16 %v2187, %v2185
    %v2212 = vpack.c.b16 %v2188, %v2186
    %v2213 = vpack.c.b16 %v2191, %v2189
    %v2214 = vpack.c.b16 %v2192, %v2190
    %v2215 = vpack.c.b16 %v2195, %v2193
    %v2216 = vpack.c.b16 %v2196, %v2194
    %v2217 = vpack.c.b16 %v2199, %v2197
    %v2218 = vpack.c.b16 %v2200, %v2198
    %v2238 = vsel %vm1560, %v2127, 0
    %2240 = vmatprep.subr.bf16.mxu0 %v2202
    %2241 = vmatpush1.bf16.msra.mxu0 %v2201
    %2242 = vmatprep.subr.bf16.mxu0 %v2204
    %2243 = vmatpush1.bf16.msra.mxu0 %v2203
    %2244 = vmatprep.subr.bf16.mxu0 %v2206
    %2245 = vmatpush1.bf16.msra.mxu0 %v2205
    %2246 = vmatprep.subr.bf16.mxu0 %v2208
    %2247 = vmatpush1.bf16.msra.mxu0 %v2207
    %2248 = vmatprep.subr.bf16.mxu0 %v2210
    %2249 = vmatpush1.bf16.msra.mxu0 %v2209
    %2250 = vmatprep.subr.bf16.mxu0 %v2212
    %2251 = vmatpush1.bf16.msra.mxu0 %v2211
    %2252 = vmatprep.subr.bf16.mxu0 %v2214
    %2253 = vmatpush1.bf16.msra.mxu0 %v2213
    %2254 = vmatprep.subr.bf16.mxu0 %v2216
    %2255 = vmatpush1.bf16.msra.mxu0 %v2215
    %2256 = vmatprep.subr.bf16.mxu0 %v2218
    %2257 = vmatpush1.bf16.msra.mxu0 %v2217
    %2258 = vmatprep.subr.bf16.mxu0 0
    %2259 = vmatpush1.bf16.msra.mxu0 0
    %2260 = vmatprep.subr.bf16.mxu0 0
    %2261 = vmatpush1.bf16.msra.mxu0 0
    %2262 = vmatprep.subr.bf16.mxu0 0
    %2263 = vmatpush1.bf16.msra.mxu0 0
    %2264 = vmatprep.subr.bf16.mxu0 0
    %2265 = vmatpush1.bf16.msra.mxu0 0
    %2266 = vmatprep.subr.bf16.mxu0 0
    %2267 = vmatpush1.bf16.msra.mxu0 0
    %2268 = vmatprep.subr.bf16.mxu0 0
    %2269 = vmatpush1.bf16.msra.mxu0 0
    %2270 = vmatprep.subr.bf16.mxu0 0
    %2271 = vmatpush1.bf16.msra.mxu0 0
    %2272 = vmatprep.mubr.bf16.mxu0 %v2238
    %2273 = vmatmul.mubr.bf16.gmra.mrb[0].mxu0 %v2126
    %v2274 = vpop.f32.mrb[0].mxu0
    %v2275 = vadd.f32 0.0, %v2274
    %v2276 = vpop.f32.mrb[0].mxu0
    %v2277 = vadd.f32 0.0, %v2276
    %v2278 = vpop.f32.mrb[0].mxu0
    %v2279 = vpop.f32.mrb[0].mxu0
    %2280 = vdwg.mxu0
    %vm2281 = vcmp.gt.f32.partialorder %v2275, 0.0
    %vm2282 = vcmp.gt.f32.partialorder %v2277, 0.0
    %v2283 = vmul.f32 %v2275, 1.442695
    %v2284 = vpow.pop %v2283
    %v2285 = vmul.f32 %v2277, 1.442695
    %v2286 = vpow.pop %v2285
    %v2287 = vsub.f32 %v2284, 1.0
    %v2288 = vsub.f32 %v2286, 1.0
    %v2289 = vmul.f32 %v2287, 1.6732632
    %v2290 = vmul.f32 %v2288, 1.6732632
    %v2291 = vsel %vm2281, %v2275, %v2289
    %v2292 = vsel %vm2282, %v2277, %v2290
    %v2293 = vmul.f32 %v2291, 1.050701
    %v2294 = vmul.f32 %v2292, 1.050701
    %v2295 = vpack.c.bf16 %v2293, %v2293
    %v2296 = vpack.c.bf16 %v2294, %v2294
    %v2297 = vld [vmem:[%s4] sm:$0xf]
    %v2298 = vld [vmem:[%s4 + $0x4] sm:$0xf]
    %v2299 = vld [vmem:[%s4 + $0x8] sm:$0xf]
    %v2300 = vld [vmem:[%s4 + $0xc] sm:$0xf]
    %v2301 = vld [vmem:[%s4 + $0x10] sm:$0xf]
    %v2302 = vld [vmem:[%s4 + $0x14] sm:$0xf]
    %v2303 = vld [vmem:[%s4 + $0x18] sm:$0xf]
    %v2304 = vld [vmem:[%s4 + $0x1c] sm:$0xf]
    %v2305 = vld [vmem:[%s4 + $0x20] sm:$0xf]
    %v2306 = vld [vmem:[%s4 + $0x24] sm:$0xf]
    %v2307 = vld [vmem:[%s4 + $0x28] sm:$0xf]
    %v2308 = vld [vmem:[%s4 + $0x2c] sm:$0xf]
    %v2309 = vld [vmem:[%s4 + $0x30] sm:$0xf]
    %v2310 = vld [vmem:[%s4 + $0x34] sm:$0xf]
    %v2311 = vld [vmem:[%s4 + $0x38] sm:$0xf]
    %v2312 = vld [vmem:[%s4 + $0x3c] sm:$0xf]
    %v2313 = vld [vmem:[%s4 + $0x40] sm:$0xf]
    %v2314 = vld [vmem:[%s4 + $0x44] sm:$0xf]
    %v2333 = vunpack.c.l.b16 %v2297
    %v2334 = vunpack.c.l.b16 %v2298
    %v2335 = vunpack.c.l.b16 %v2299
    %v2336 = vunpack.c.l.b16 %v2300
    %v2337 = vunpack.c.l.b16 %v2301
    %v2338 = vunpack.c.l.b16 %v2302
    %v2339 = vunpack.c.l.b16 %v2303
    %v2340 = vunpack.c.l.b16 %v2304
    %v2341 = vunpack.c.l.b16 %v2305
    %v2342 = vunpack.c.l.b16 %v2306
    %v2343 = vunpack.c.l.b16 %v2307
    %v2344 = vunpack.c.l.b16 %v2308
    %v2345 = vunpack.c.l.b16 %v2309
    %v2346 = vunpack.c.l.b16 %v2310
    %v2347 = vunpack.c.l.b16 %v2311
    %v2348 = vunpack.c.l.b16 %v2312
    %v2349 = vunpack.c.l.b16 %v2313
    %v2350 = vunpack.c.l.b16 %v2314
    %v2351 = vpack.c.b16 %v2334, %v2333
    %v2352 = vpack.c.b16 %v2336, %v2335
    %v2353 = vpack.c.b16 %v2338, %v2337
    %v2354 = vpack.c.b16 %v2340, %v2339
    %v2355 = vpack.c.b16 %v2342, %v2341
    %v2356 = vpack.c.b16 %v2344, %v2343
    %v2357 = vpack.c.b16 %v2346, %v2345
    %v2358 = vpack.c.b16 %v2348, %v2347
    %v2359 = vpack.c.b16 %v2350, %v2349
    %v2370 = vsel %vm1560, %v2296, 0
    %2372 = vmatprep.subr.bf16.mxu0 0
    %2373 = vmatpush1.bf16.msra.mxu0 %v2351
    %2374 = vmatprep.subr.bf16.mxu0 0
    %2375 = vmatpush1.bf16.msra.mxu0 %v2352
    %2376 = vmatprep.subr.bf16.mxu0 0
    %2377 = vmatpush1.bf16.msra.mxu0 %v2353
    %2378 = vmatprep.subr.bf16.mxu0 0
    %2379 = vmatpush1.bf16.msra.mxu0 %v2354
    %2380 = vmatprep.subr.bf16.mxu0 0
    %2381 = vmatpush1.bf16.msra.mxu0 %v2355
    %2382 = vmatprep.subr.bf16.mxu0 0
    %2383 = vmatpush1.bf16.msra.mxu0 %v2356
    %2384 = vmatprep.subr.bf16.mxu0 0
    %2385 = vmatpush1.bf16.msra.mxu0 %v2357
    %2386 = vmatprep.subr.bf16.mxu0 0
    %2387 = vmatpush1.bf16.msra.mxu0 %v2358
    %2388 = vmatprep.subr.bf16.mxu0 0
    %2389 = vmatpush1.bf16.msra.mxu0 %v2359
    %2390 = vmatprep.subr.bf16.mxu0 0
    %2391 = vmatpush1.bf16.msra.mxu0 0
    %2392 = vmatprep.subr.bf16.mxu0 0
    %2393 = vmatpush1.bf16.msra.mxu0 0
    %2394 = vmatprep.subr.bf16.mxu0 0
    %2395 = vmatpush1.bf16.msra.mxu0 0
    %2396 = vmatprep.subr.bf16.mxu0 0
    %2397 = vmatpush1.bf16.msra.mxu0 0
    %2398 = vmatprep.subr.bf16.mxu0 0
    %2399 = vmatpush1.bf16.msra.mxu0 0
    %2400 = vmatprep.subr.bf16.mxu0 0
    %2401 = vmatpush1.bf16.msra.mxu0 0
    %2402 = vmatprep.subr.bf16.mxu0 0
    %2403 = vmatpush1.bf16.msra.mxu0 0
    %2404 = vmatprep.mubr.bf16.mxu0 %v2370
    %2405 = vmatmul.mubr.bf16.gmra.mrb[0].mxu0 %v2295
    %v2406 = vpop.f32.mrb[0].mxu0
    %v2407 = vadd.f32 0.0, %v2406
    %v2408 = vpop.f32.mrb[0].mxu0
    %v2409 = vpop.f32.mrb[0].mxu0
    %v2410 = vpop.f32.mrb[0].mxu0
    %2411 = vdwg.mxu0
    %v2412 = vsub.f32 0.0, %v2407
    %v2413 = vmul.f32 %v2412, 1.442695
    %v2414 = vpow.pop %v2413
    %v2415 = vadd.f32 %v2414, 1.0
    %v2416 = vrcp.pop %v2415
    %v2417 = vmul.f32 127.0, %v2416
    %v2418 = vsel %vm1435, %v1448, %v2417
    %2419 = vst [vmem:[#allocation2] sm:$0x3] %v2418
    // Predicated region
    $region22: #{tpu_custom_call.1} parent=1 // pred_check
      _
    $region23: #{tpu_custom_call.1} parent=1 // pred_check_branch
      %2421 = sbr.rel (0) target = $region25
    $region24: #{tpu_custom_call.1} parent=1 // pred_region
      %s2423 = ssub.s32 32, 32
      %2424 = vsyncadd [#allocation3], %s2423
      %s2426 = sshll.u32 [#allocation2], 4
      %s2427 = int_to_ptr.vmem [resolvable:$true] %s2426
      %2429 = dma.vmem_to_hbm [thread:$0]  %s2427, 32, %s5, [#allocation3]
    $region25: #{tpu_custom_call.1} parent=1 // pred_fallthru
      _
    // Predicated region
    $region26: #{tpu_custom_call.1} parent=1 // pred_check
      _
    $region27: #{tpu_custom_call.1} parent=1 // pred_check_branch
      %2431 = sbr.rel (0) target = $region29
    $region28: #{tpu_custom_call.1} parent=1 // pred_region
      %2432 = dma.done [#allocation3], 32
    $region29: #{tpu_custom_call.1} parent=1 // pred_fallthru
      _
    %2433 = vsyncpa [#allocation3], 1

</llo_original>
